<compile_context>
chip_gen: v7x
topology: tpu7x:2x2x1
jax: 0.10.0
libtpu: 0.0.40
codegen_flags: <defaults>
</compile_context>

<pallas_src>
import functools
import jax
import jax.numpy as jnp
from jax import lax
from jax.experimental import pallas as pl
from jax.experimental.pallas import tpu as pltpu


# --------------------------------------------------------------------------
# Fused encoder + decoder kernel (one grid step = Bt batch elements).
# --------------------------------------------------------------------------
def _masked_softmax(scores, mask):
    """Row-wise softmax over mask>0 columns; exactly zero elsewhere."""
    s = jnp.where(mask > 0, scores, jnp.float32(-1e30))
    m = jnp.max(s, axis=-1, keepdims=True)
    e = jnp.where(mask > 0, jnp.exp(s - m), 0.0)
    denom = jnp.maximum(jnp.sum(e, axis=-1, keepdims=True), 1e-30)
    return e * pl.reciprocal(denom, approx=True)


def fused_mem_model_kernel(
        src_emb_ref,    # (1, Bt*S,  E)      bf16
        qa_emb_ref,     # (1, Bt*Nw, E)      bf16
        tgt_emb_ref,    # (1, Bt*T,  Ed)     bf16
        mask_bd_ref,    # (1, Bt, Bt*Ltot)   f32  [src | sent | word], batch-block-diag
        pool_src_ref,   # (1, Bt, Bt*S)      f32  masked-mean pooling (block-diag)
        pool_sent_ref,  # (1, Bt*Ns, Bt*Nw)  f32  sentence pooling (block-diag)
        srep_ref,       # (Bt*T, Bt)         f32  row-repeat / batch-select matrix
        w_src_ref, w_qa_ref, w_sent_ref,            # bf16
        w_dec_ref, w_state_ref, w_out_ref,          # bf16
        b_src_ref, b_qa_ref, b_sent_ref, b_dec_ref, b_out_ref,   # f32 (1, H)
        dec_out_ref,    # (1, Bt*T, H)       f32
        attn_ref,       # (1, Bt*T, Ltot)    f32
        *, Bt, S, Ns, Nw, T, H):
    f32 = jnp.float32
    bf16 = jnp.bfloat16
    BS, BN, BW = Bt * S, Bt * Ns, Bt * Nw

    # ------------------------- encoder -------------------------
    src_bank = jnp.tanh(
        jnp.dot(src_emb_ref[0], w_src_ref[...], preferred_element_type=f32)
        + b_src_ref[...])                                        # (Bt*S, H)
    qa_word_bank = jnp.tanh(
        jnp.dot(qa_emb_ref[0], w_qa_ref[...], preferred_element_type=f32)
        + b_qa_ref[...])                                         # (Bt*Nw, H)

    src_state = jnp.dot(pool_src_ref[0], src_bank,
                        preferred_element_type=f32)              # (Bt, H) masked mean
    sent_mean = jnp.dot(pool_sent_ref[0], qa_word_bank,
                        preferred_element_type=f32)              # (Bt*Ns, H)
    qa_sent_bank = jnp.tanh(
        jnp.dot(sent_mean.astype(bf16), w_sent_ref[...],
                preferred_element_type=f32)
        + b_sent_ref[...])                                       # (Bt*Ns, H)

    # --------------------- decoder hidden states ---------------------
    srep = srep_ref[...]                                         # (Bt*T, Bt)
    state_proj = jnp.dot(src_state.astype(bf16), w_state_ref[...],
                         preferred_element_type=f32)             # (Bt, H)
    state_rows = jnp.dot(srep, state_proj,
                         preferred_element_type=f32)             # (Bt*T, H)
    dec_h = jnp.tanh(
        jnp.dot(tgt_emb_ref[0], w_dec_ref[...], preferred_element_type=f32)
        + state_rows + b_dec_ref[...])                           # (Bt*T, H)

    # ------------- attention over the three memory banks -------------
    scale = 1.0 / float(H) ** 0.5
    dec_h_s = (dec_h * scale).astype(bf16)     # scale hoisted once onto queries
    src_bank_bf = src_bank.astype(bf16)
    sent_bank_bf = qa_sent_bank.astype(bf16)
    word_bank_bf = qa_word_bank.astype(bf16)

    # length + cross-batch (block-diagonal) masks, expanded over the T rows.
    mask_big = jnp.dot(srep, mask_bd_ref[0],
                       preferred_element_type=f32)               # (Bt*T, Bt*Ltot)
    m_src = mask_big[:, :BS]
    m_sent = mask_big[:, BS:BS + BN]
    m_word = mask_big[:, BS + BN:BS + BN + BW]

    dims = (((1,), (1,)), ((), ()))
    sc_src = lax.dot_general(dec_h_s, src_bank_bf, dims, preferred_element_type=f32)
    sc_sent = lax.dot_general(dec_h_s, sent_bank_bf, dims, preferred_element_type=f32)
    sc_word = lax.dot_general(dec_h_s, word_bank_bf, dims, preferred_element_type=f32)

    # off-batch columns are masked out, so these are exact per-batch softmaxes
    attn_src = _masked_softmax(sc_src, m_src)                    # (Bt*T, Bt*S)
    attn_sent = _masked_softmax(sc_sent, m_sent)                 # (Bt*T, Bt*Ns)
    attn_word = _masked_softmax(sc_word, m_word)                 # (Bt*T, Bt*Nw)

    # off-batch attn entries are exactly zero -> per-batch contexts
    ctx_src = jnp.dot(attn_src.astype(bf16), src_bank_bf, preferred_element_type=f32)
    ctx_sent = jnp.dot(attn_sent.astype(bf16), sent_bank_bf, preferred_element_type=f32)
    ctx_word = jnp.dot(attn_word.astype(bf16), word_bank_bf, preferred_element_type=f32)

    # single (Bt*T, 4H) x (4H, H) output projection (K = 4H fills the MXU).
    cat = jnp.concatenate([ctx_src, ctx_sent, ctx_word, dec_h],
                          axis=-1).astype(bf16)                  # (Bt*T, 4H)
    dec_out_ref[0] = jnp.tanh(
        jnp.dot(cat, w_out_ref[...], preferred_element_type=f32) + b_out_ref[...])

    # lane-dense attention output: select each batch's own block-diagonal
    # columns, concatenate [src | sent | word], one full-block store.
    def take_diag(attn, L):
        acc = None
        for b in range(Bt):                      # Bt is small & static
            piece = attn[:, b * L:(b + 1) * L] * srep[:, b:b + 1]
            acc = piece if acc is None else acc + piece
        return acc                                # (Bt*T, L)

    attn_ref[0] = jnp.concatenate(
        [take_diag(attn_src, S), take_diag(attn_sent, Ns), take_diag(attn_word, Nw)],
        axis=-1)                                  # (Bt*T, Ltot)


# --------------------------------------------------------------------------
# Wrapper: embeddings, masks, block-diagonal pooling matrices, layout glue.
# --------------------------------------------------------------------------
def mem_model_forward(params, src, src_lengths, qa, qa_sent_lengths,
                      qa_word_lengths, tgt, batch_block=None):
    """
    src:              (S, B)      int32 token ids   (len x batch)
    src_lengths:      (B,)        int32
    qa:               (Ns, Lw, B) int32 token ids
    qa_sent_lengths:  (B,)        int32
    qa_word_lengths:  (Ns, B)     int32
    tgt:              (Tgt, B)    int32 token ids
    returns (decoder_outputs [T,B,H], attns dict, dec_state [B,H])
    """
    f32, bf16 = jnp.float32, jnp.bfloat16
    S, B = src.shape
    Ns, Lw, _ = qa.shape
    Nw = Ns * Lw
    tgt = tgt[:-1]                                 # mirror `tgt = tgt[:-1]`
    T = tgt.shape[0]
    E = params["emb_src"].shape[1]
    Ed = params["emb_tgt"].shape[1]
    H = params["w_src"].shape[1]
    Ltot = S + Ns + Nw

    # batch super-block: fill the MXU M dimension but keep >= 2 grid steps so
    # both v7x TensorCores can be used ("parallel" grid axis).
    Bt = batch_block if batch_block is not None else min(8, max(1, B // 2))
    Bt = max(1, min(Bt, B))
    while B % Bt:
        Bt -= 1
    G = B // Bt

    # ----- embeddings: batch-major gather (no post-gather transpose) -----
    src_emb = params["emb_src"][src.T].astype(bf16)                 # (B,S,E)
    qa_bt = qa.transpose(2, 0, 1).reshape(B, Nw)                    # (B,Nw) ids
    qa_emb = params["emb_qa"][qa_bt].astype(bf16)                   # (B,Nw,E)
    tgt_emb = params["emb_tgt"][tgt.T].astype(bf16)                 # (B,T,Ed)

    # ----- length masks -----
    src_mask = (jnp.arange(S)[None, :] < src_lengths[:, None]).astype(f32)        # (B,S)
    sent_mask = (jnp.arange(Ns)[None, :] < qa_sent_lengths[:, None]).astype(f32)  # (B,Ns)
    wlen = qa_word_lengths.T                                                       # (B,Ns)
    word_mask3 = ((jnp.arange(Lw)[None, None, :] < wlen[:, :, None])
                  & (sent_mask[:, :, None] > 0)).astype(f32)                       # (B,Ns,Lw)
    word_mask = word_mask3.reshape(B, Nw)                                          # (B,Nw)

    eye_bt = jnp.eye(Bt, dtype=f32)

    def blockdiag(m):                    # (B, L) -> (G, Bt, Bt*L), batch-block-diag
        L = m.shape[-1]
        out = m.reshape(G, Bt, 1, L) * eye_bt[None, :, :, None]     # (G,Bt,Bt,L)
        return out.reshape(G, Bt, Bt * L)

    mask_bd = jnp.concatenate(
        [blockdiag(src_mask), blockdiag(sent_mask), blockdiag(word_mask)],
        axis=-1)                                                    # (G,Bt,Bt*Ltot)

    src_norm = src_mask / jnp.maximum(src_lengths[:, None].astype(f32), 1.0)
    pool_src = blockdiag(src_norm)                                  # (G,Bt,Bt*S)

    wnorm = word_mask3 / jnp.maximum(jnp.sum(word_mask3, -1, keepdims=True), 1.0)
    eye_ns = jnp.eye(Ns, dtype=f32)
    pool_b = (wnorm[:, :, None, :] * eye_ns[None, :, :, None]).reshape(B, Ns, Nw)
    pool_sent = (pool_b.reshape(G, Bt, 1, Ns, Nw)
                 * eye_bt[None, :, :, None, None])                  # (G,Bt,Bt,Ns,Nw)
    pool_sent = pool_sent.transpose(0, 1, 3, 2, 4).reshape(G, Bt * Ns, Bt * Nw)

    srep = jnp.repeat(eye_bt, T, axis=0)                            # (Bt*T, Bt)

    # ----- fold batch super-blocks into the matmul M dimension -----
    src_emb_g = src_emb.reshape(G, Bt * S, E)
    qa_emb_g = qa_emb.reshape(G, Bt * Nw, E)
    tgt_emb_g = tgt_emb.reshape(G, Bt * T, Ed)

    wbf = lambda k: params[k].astype(bf16)
    per_g = lambda g: (g, 0, 0)
    full2 = lambda g: (0, 0)

    kernel = functools.partial(fused_mem_model_kernel,
                               Bt=Bt, S=S, Ns=Ns, Nw=Nw, T=T, H=H)

    dec_out_g, attn_g = pl.pallas_call(
        kernel,
        out_shape=(
            jax.ShapeDtypeStruct((G, Bt * T, H), f32),
            jax.ShapeDtypeStruct((G, Bt * T, Ltot), f32),
        ),
        grid=(G,),
        in_specs=[
            pl.BlockSpec((1, Bt * S, E), per_g),
            pl.BlockSpec((1, Bt * Nw, E), per_g),
            pl.BlockSpec((1, Bt * T, Ed), per_g),
            pl.BlockSpec((1, Bt, Bt * Ltot), per_g),
            pl.BlockSpec((1, Bt, Bt * S), per_g),
            pl.BlockSpec((1, Bt * Ns, Bt * Nw), per_g),
            pl.BlockSpec((Bt * T, Bt), full2),
            pl.BlockSpec((E, H), full2),
            pl.BlockSpec((E, H), full2),
            pl.BlockSpec((H, H), full2),
            pl.BlockSpec((Ed, H), full2),
            pl.BlockSpec((H, H), full2),
            pl.BlockSpec((4 * H, H), full2),
            pl.BlockSpec((1, H), full2),
            pl.BlockSpec((1, H), full2),
            pl.BlockSpec((1, H), full2),
            pl.BlockSpec((1, H), full2),
            pl.BlockSpec((1, H), full2),
        ],
        out_specs=(
            pl.BlockSpec((1, Bt * T, H), per_g),
            pl.BlockSpec((1, Bt * T, Ltot), per_g),
        ),
        compiler_params=pltpu.CompilerParams(
            dimension_semantics=("parallel",)),
    )(src_emb_g, qa_emb_g, tgt_emb_g, mask_bd, pool_src, pool_sent, srep,
      wbf("w_src"), wbf("w_qa"), wbf("w_sent"),
      wbf("w_dec"), wbf("w_state"), wbf("w_out"),
      params["b_src"], params["b_qa"], params["b_sent"],
      params["b_dec"], params["b_out"])

    # back to OpenNMT time-major convention [tgt_len x batch x ...]
    dec_out = dec_out_g.reshape(B, T, H)
    attn_cat = attn_g.reshape(B, T, Ltot).transpose(1, 0, 2)        # (T,B,Ltot)
    decoder_outputs = dec_out.transpose(1, 0, 2)                    # (T,B,H)
    attns = {
        "std": attn_cat[..., :S],                                   # (T,B,S)
        "qa_sent": attn_cat[..., S:S + Ns],                         # (T,B,Ns)
        "qa_word": attn_cat[..., S + Ns:],                          # (T,B,Nw)
    }
    # TODO(synk): the original DecoderState carries RNN hidden/cell tuples;
    # here we expose the last decoder hidden state as the final state.
    dec_state = dec_out[:, -1, :]                                   # (B,H)
    return decoder_outputs, attns, dec_state


def init_params(key, vocab_src=50, vocab_qa=50, vocab_tgt=50,
                E=16, Ed=16, H=32):
    ks = jax.random.split(key, 16)
    n = lambda k, shape: (0.1 * jax.random.normal(k, shape)).astype(jnp.float32)
    return {
        "emb_src": n(ks[0], (vocab_src, E)),
        "emb_qa": n(ks[1], (vocab_qa, E)),
        "emb_tgt": n(ks[2], (vocab_tgt, Ed)),
        "w_src": n(ks[3], (E, H)), "b_src": n(ks[4], (1, H)),
        "w_qa": n(ks[5], (E, H)), "b_qa": n(ks[6], (1, H)),
        "w_sent": n(ks[7], (H, H)), "b_sent": n(ks[8], (1, H)),
        "w_dec": n(ks[9], (Ed, H)), "w_state": n(ks[10], (H, H)),
        "b_dec": n(ks[11], (1, H)),
        "w_out": n(ks[12], (4 * H, H)), "b_out": n(ks[13], (1, H)),
    }


if __name__ == "__main__":
    key = jax.random.PRNGKey(0)
    k_p, k_src, k_qa, k_tgt, k_l1, k_l2, k_l3 = jax.random.split(key, 7)

    B, S, Ns, Lw, Tgt = 4, 12, 4, 6, 8
    Nw = Ns * Lw
    vocab, H = 50, 32
    params = init_params(k_p, vocab, vocab, vocab, E=16, Ed=16, H=H)

    src = jax.random.randint(k_src, (S, B), 0, vocab, dtype=jnp.int32)
    qa = jax.random.randint(k_qa, (Ns, Lw, B), 0, vocab, dtype=jnp.int32)
    tgt = jax.random.randint(k_tgt, (Tgt, B), 0, vocab, dtype=jnp.int32)
    src_lengths = jax.random.randint(k_l1, (B,), 3, S + 1, dtype=jnp.int32)
    qa_sent_lengths = jax.random.randint(k_l2, (B,), 1, Ns + 1, dtype=jnp.int32)
    qa_word_lengths = jax.random.randint(k_l3, (Ns, B), 1, Lw + 1,
                                         dtype=jnp.int32)

    fwd = jax.jit(functools.partial(mem_model_forward, params))
    dec_out, attns, dec_state = fwd(src, src_lengths, qa, qa_sent_lengths,
                                    qa_word_lengths, tgt)
    jax.block_until_ready((dec_out, attns, dec_state))

    T = Tgt - 1
    assert dec_out.shape == (T, B, H)
    assert attns["std"].shape == (T, B, S)
    assert attns["qa_sent"].shape == (T, B, Ns)
    assert attns["qa_word"].shape == (T, B, Nw)
    assert dec_state.shape == (B, H)
    assert bool(jnp.all(jnp.isfinite(dec_out)))
    # attention distributions sum to ~1 over the (masked) memory axis
    # (tolerance accounts for bf16 operands + EUP approx reciprocal)
    assert bool(jnp.all(jnp.abs(jnp.sum(attns["std"], -1) - 1.0) < 1e-2))
    assert bool(jnp.all(jnp.abs(jnp.sum(attns["qa_sent"], -1) - 1.0) < 1e-2))
    assert bool(jnp.all(jnp.abs(jnp.sum(attns["qa_word"], -1) - 1.0) < 1e-2))

    print("KERNEL_OK")
</pallas_src>

<mosaic_0001>
module attributes {stable_mosaic.version = 11 : i64} {
  func.func @fused_mem_model_kernel(%arg0: i32, %arg1: memref<1x24x16xbf16, #tpu.memory_space<vmem>>, %arg2: memref<1x48x16xbf16, #tpu.memory_space<vmem>>, %arg3: memref<1x14x16xbf16, #tpu.memory_space<vmem>>, %arg4: memref<1x2x80xf32, #tpu.memory_space<vmem>>, %arg5: memref<1x2x24xf32, #tpu.memory_space<vmem>>, %arg6: memref<1x8x48xf32, #tpu.memory_space<vmem>>, %arg7: memref<14x2xf32, #tpu.memory_space<vmem>>, %arg8: memref<16x32xbf16, #tpu.memory_space<vmem>>, %arg9: memref<16x32xbf16, #tpu.memory_space<vmem>>, %arg10: memref<32x32xbf16, #tpu.memory_space<vmem>>, %arg11: memref<16x32xbf16, #tpu.memory_space<vmem>>, %arg12: memref<32x32xbf16, #tpu.memory_space<vmem>>, %arg13: memref<128x32xbf16, #tpu.memory_space<vmem>>, %arg14: memref<1x32xf32, #tpu.memory_space<vmem>>, %arg15: memref<1x32xf32, #tpu.memory_space<vmem>>, %arg16: memref<1x32xf32, #tpu.memory_space<vmem>>, %arg17: memref<1x32xf32, #tpu.memory_space<vmem>>, %arg18: memref<1x32xf32, #tpu.memory_space<vmem>>, %arg19: memref<1x14x32xf32, #tpu.memory_space<vmem>>, %arg20: memref<1x14x40xf32, #tpu.memory_space<vmem>>) attributes {dimension_semantics = [#tpu.dimension_semantics<parallel>], iteration_bounds = array<i64: 2>, scalar_prefetch = 0 : i64, scratch_operands = 0 : i64, tpu.core_type = #tpu.core_type<tc>, window_params = [{transform_indices = @transform_0, window_bounds = array<i64: 1, 24, 16>}, {transform_indices = @transform_1, window_bounds = array<i64: 1, 48, 16>}, {transform_indices = @transform_2, window_bounds = array<i64: 1, 14, 16>}, {transform_indices = @transform_3, window_bounds = array<i64: 1, 2, 80>}, {transform_indices = @transform_4, window_bounds = array<i64: 1, 2, 24>}, {transform_indices = @transform_5, window_bounds = array<i64: 1, 8, 48>}, {pipeline_mode = #tpu.pipeline_mode<synchronous>, transform_indices = @transform_6, window_bounds = array<i64: 14, 2>}, {pipeline_mode = #tpu.pipeline_mode<synchronous>, transform_indices = @transform_7, window_bounds = array<i64: 16, 32>}, {pipeline_mode = #tpu.pipeline_mode<synchronous>, transform_indices = @transform_8, window_bounds = array<i64: 16, 32>}, {pipeline_mode = #tpu.pipeline_mode<synchronous>, transform_indices = @transform_9, window_bounds = array<i64: 32, 32>}, {pipeline_mode = #tpu.pipeline_mode<synchronous>, transform_indices = @transform_10, window_bounds = array<i64: 16, 32>}, {pipeline_mode = #tpu.pipeline_mode<synchronous>, transform_indices = @transform_11, window_bounds = array<i64: 32, 32>}, {pipeline_mode = #tpu.pipeline_mode<synchronous>, transform_indices = @transform_12, window_bounds = array<i64: 128, 32>}, {pipeline_mode = #tpu.pipeline_mode<synchronous>, transform_indices = @transform_13, window_bounds = array<i64: 1, 32>}, {pipeline_mode = #tpu.pipeline_mode<synchronous>, transform_indices = @transform_14, window_bounds = array<i64: 1, 32>}, {pipeline_mode = #tpu.pipeline_mode<synchronous>, transform_indices = @transform_15, window_bounds = array<i64: 1, 32>}, {pipeline_mode = #tpu.pipeline_mode<synchronous>, transform_indices = @transform_16, window_bounds = array<i64: 1, 32>}, {pipeline_mode = #tpu.pipeline_mode<synchronous>, transform_indices = @transform_17, window_bounds = array<i64: 1, 32>}, {transform_indices = @transform_18, window_bounds = array<i64: 1, 14, 32>}, {transform_indices = @transform_19, window_bounds = array<i64: 1, 14, 40>}]} {
    %c0 = arith.constant 0 : index
    %c0_0 = arith.constant 0 : index
    %c0_1 = arith.constant 0 : index
    %0 = vector.load %arg1[%c0, %c0_0, %c0_1] : memref<1x24x16xbf16, #tpu.memory_space<vmem>>, vector<1x24x16xbf16>
    %1 = vector.shape_cast %0 : vector<1x24x16xbf16> to vector<24x16xbf16>
    %c0_2 = arith.constant 0 : index
    %c0_3 = arith.constant 0 : index
    %2 = vector.load %arg8[%c0_2, %c0_3] : memref<16x32xbf16, #tpu.memory_space<vmem>>, vector<16x32xbf16>
    %cst = arith.constant dense<0.000000e+00> : vector<24x32xf32>
    %3 = tpu.matmul %1, %2, %cst {dimension_numbers = #tpu.dot_dimension_numbers<[1], [0], [0], [1], [0, 0, 1, 1], [], []>} : vector<24x16xbf16>, vector<16x32xbf16>, vector<24x32xf32> -> vector<24x32xf32>
    %c0_4 = arith.constant 0 : index
    %c0_5 = arith.constant 0 : index
    %4 = vector.load %arg14[%c0_4, %c0_5] : memref<1x32xf32, #tpu.memory_space<vmem>>, vector<1x32xf32>
    %5 = vector.broadcast %4 : vector<1x32xf32> to vector<24x32xf32>
    %6 = arith.addf %3, %5 : vector<24x32xf32>
    %7 = math.tanh %6 : vector<24x32xf32>
    %c0_6 = arith.constant 0 : index
    %c0_7 = arith.constant 0 : index
    %c0_8 = arith.constant 0 : index
    %8 = vector.load %arg2[%c0_6, %c0_7, %c0_8] : memref<1x48x16xbf16, #tpu.memory_space<vmem>>, vector<1x48x16xbf16>
    %9 = vector.shape_cast %8 : vector<1x48x16xbf16> to vector<48x16xbf16>
    %c0_9 = arith.constant 0 : index
    %c0_10 = arith.constant 0 : index
    %10 = vector.load %arg9[%c0_9, %c0_10] : memref<16x32xbf16, #tpu.memory_space<vmem>>, vector<16x32xbf16>
    %cst_11 = arith.constant dense<0.000000e+00> : vector<48x32xf32>
    %11 = tpu.matmul %9, %10, %cst_11 {dimension_numbers = #tpu.dot_dimension_numbers<[1], [0], [0], [1], [0, 0, 1, 1], [], []>} : vector<48x16xbf16>, vector<16x32xbf16>, vector<48x32xf32> -> vector<48x32xf32>
    %c0_12 = arith.constant 0 : index
    %c0_13 = arith.constant 0 : index
    %12 = vector.load %arg15[%c0_12, %c0_13] : memref<1x32xf32, #tpu.memory_space<vmem>>, vector<1x32xf32>
    %13 = vector.broadcast %12 : vector<1x32xf32> to vector<48x32xf32>
    %14 = arith.addf %11, %13 : vector<48x32xf32>
    %15 = math.tanh %14 : vector<48x32xf32>
    %c0_14 = arith.constant 0 : index
    %c0_15 = arith.constant 0 : index
    %c0_16 = arith.constant 0 : index
    %16 = vector.load %arg5[%c0_14, %c0_15, %c0_16] : memref<1x2x24xf32, #tpu.memory_space<vmem>>, vector<1x2x24xf32>
    %17 = vector.shape_cast %16 : vector<1x2x24xf32> to vector<2x24xf32>
    %cst_17 = arith.constant dense<0.000000e+00> : vector<2x32xf32>
    %18 = tpu.matmul %17, %7, %cst_17 {dimension_numbers = #tpu.dot_dimension_numbers<[1], [0], [0], [1], [0, 0, 1, 1], [], []>} : vector<2x24xf32>, vector<24x32xf32>, vector<2x32xf32> -> vector<2x32xf32>
    %c0_18 = arith.constant 0 : index
    %c0_19 = arith.constant 0 : index
    %c0_20 = arith.constant 0 : index
    %19 = vector.load %arg6[%c0_18, %c0_19, %c0_20] : memref<1x8x48xf32, #tpu.memory_space<vmem>>, vector<1x8x48xf32>
    %20 = vector.shape_cast %19 : vector<1x8x48xf32> to vector<8x48xf32>
    %cst_21 = arith.constant dense<0.000000e+00> : vector<8x32xf32>
    %21 = tpu.matmul %20, %15, %cst_21 {dimension_numbers = #tpu.dot_dimension_numbers<[1], [0], [0], [1], [0, 0, 1, 1], [], []>} : vector<8x48xf32>, vector<48x32xf32>, vector<8x32xf32> -> vector<8x32xf32>
    %22 = arith.truncf %21 : vector<8x32xf32> to vector<8x32xbf16>
    %c0_22 = arith.constant 0 : index
    %c0_23 = arith.constant 0 : index
    %23 = vector.load %arg10[%c0_22, %c0_23] : memref<32x32xbf16, #tpu.memory_space<vmem>>, vector<32x32xbf16>
    %cst_24 = arith.constant dense<0.000000e+00> : vector<8x32xf32>
    %24 = tpu.matmul %22, %23, %cst_24 {dimension_numbers = #tpu.dot_dimension_numbers<[1], [0], [0], [1], [0, 0, 1, 1], [], []>} : vector<8x32xbf16>, vector<32x32xbf16>, vector<8x32xf32> -> vector<8x32xf32>
    %c0_25 = arith.constant 0 : index
    %c0_26 = arith.constant 0 : index
    %25 = vector.load %arg16[%c0_25, %c0_26] : memref<1x32xf32, #tpu.memory_space<vmem>>, vector<1x32xf32>
    %26 = vector.broadcast %25 : vector<1x32xf32> to vector<8x32xf32>
    %27 = arith.addf %24, %26 : vector<8x32xf32>
    %28 = math.tanh %27 : vector<8x32xf32>
    %c0_27 = arith.constant 0 : index
    %c0_28 = arith.constant 0 : index
    %29 = vector.load %arg7[%c0_27, %c0_28] : memref<14x2xf32, #tpu.memory_space<vmem>>, vector<14x2xf32>
    %30 = arith.truncf %18 : vector<2x32xf32> to vector<2x32xbf16>
    %c0_29 = arith.constant 0 : index
    %c0_30 = arith.constant 0 : index
    %31 = vector.load %arg12[%c0_29, %c0_30] : memref<32x32xbf16, #tpu.memory_space<vmem>>, vector<32x32xbf16>
    %cst_31 = arith.constant dense<0.000000e+00> : vector<2x32xf32>
    %32 = tpu.matmul %30, %31, %cst_31 {dimension_numbers = #tpu.dot_dimension_numbers<[1], [0], [0], [1], [0, 0, 1, 1], [], []>} : vector<2x32xbf16>, vector<32x32xbf16>, vector<2x32xf32> -> vector<2x32xf32>
    %cst_32 = arith.constant dense<0.000000e+00> : vector<14x32xf32>
    %33 = tpu.matmul %29, %32, %cst_32 {dimension_numbers = #tpu.dot_dimension_numbers<[1], [0], [0], [1], [0, 0, 1, 1], [], []>} : vector<14x2xf32>, vector<2x32xf32>, vector<14x32xf32> -> vector<14x32xf32>
    %c0_33 = arith.constant 0 : index
    %c0_34 = arith.constant 0 : index
    %c0_35 = arith.constant 0 : index
    %34 = vector.load %arg3[%c0_33, %c0_34, %c0_35] : memref<1x14x16xbf16, #tpu.memory_space<vmem>>, vector<1x14x16xbf16>
    %35 = vector.shape_cast %34 : vector<1x14x16xbf16> to vector<14x16xbf16>
    %c0_36 = arith.constant 0 : index
    %c0_37 = arith.constant 0 : index
    %36 = vector.load %arg11[%c0_36, %c0_37] : memref<16x32xbf16, #tpu.memory_space<vmem>>, vector<16x32xbf16>
    %cst_38 = arith.constant dense<0.000000e+00> : vector<14x32xf32>
    %37 = tpu.matmul %35, %36, %cst_38 {dimension_numbers = #tpu.dot_dimension_numbers<[1], [0], [0], [1], [0, 0, 1, 1], [], []>} : vector<14x16xbf16>, vector<16x32xbf16>, vector<14x32xf32> -> vector<14x32xf32>
    %38 = arith.addf %37, %33 : vector<14x32xf32>
    %c0_39 = arith.constant 0 : index
    %c0_40 = arith.constant 0 : index
    %39 = vector.load %arg17[%c0_39, %c0_40] : memref<1x32xf32, #tpu.memory_space<vmem>>, vector<1x32xf32>
    %40 = vector.broadcast %39 : vector<1x32xf32> to vector<14x32xf32>
    %41 = arith.addf %38, %40 : vector<14x32xf32>
    %42 = math.tanh %41 : vector<14x32xf32>
    %cst_41 = arith.constant 0.176776692 : f32
    %43 = vector.broadcast %cst_41 : f32 to vector<14x32xf32>
    %44 = arith.mulf %42, %43 : vector<14x32xf32>
    %45 = arith.truncf %44 : vector<14x32xf32> to vector<14x32xbf16>
    %46 = arith.truncf %7 : vector<24x32xf32> to vector<24x32xbf16>
    %47 = arith.truncf %28 : vector<8x32xf32> to vector<8x32xbf16>
    %48 = arith.truncf %15 : vector<48x32xf32> to vector<48x32xbf16>
    %c0_42 = arith.constant 0 : index
    %c0_43 = arith.constant 0 : index
    %c0_44 = arith.constant 0 : index
    %49 = vector.load %arg4[%c0_42, %c0_43, %c0_44] : memref<1x2x80xf32, #tpu.memory_space<vmem>>, vector<1x2x80xf32>
    %50 = vector.shape_cast %49 : vector<1x2x80xf32> to vector<2x80xf32>
    %cst_45 = arith.constant dense<0.000000e+00> : vector<14x80xf32>
    %51 = tpu.matmul %29, %50, %cst_45 {dimension_numbers = #tpu.dot_dimension_numbers<[1], [0], [0], [1], [0, 0, 1, 1], [], []>} : vector<14x2xf32>, vector<2x80xf32>, vector<14x80xf32> -> vector<14x80xf32>
    %52 = vector.extract_strided_slice %51 {offsets = [0, 0], sizes = [14, 24], strides = [1, 1]} : vector<14x80xf32> to vector<14x24xf32>
    %53 = vector.extract_strided_slice %51 {offsets = [0, 24], sizes = [14, 8], strides = [1, 1]} : vector<14x80xf32> to vector<14x8xf32>
    %54 = vector.extract_strided_slice %51 {offsets = [0, 32], sizes = [14, 48], strides = [1, 1]} : vector<14x80xf32> to vector<14x48xf32>
    %cst_46 = arith.constant dense<0.000000e+00> : vector<14x24xf32>
    %55 = tpu.matmul %45, %46, %cst_46 {dimension_numbers = #tpu.dot_dimension_numbers<[1], [1], [0], [0], [0, 0, 1, 0], [], []>} : vector<14x32xbf16>, vector<24x32xbf16>, vector<14x24xf32> -> vector<14x24xf32>
    %cst_47 = arith.constant dense<0.000000e+00> : vector<14x8xf32>
    %56 = tpu.matmul %45, %47, %cst_47 {dimension_numbers = #tpu.dot_dimension_numbers<[1], [1], [0], [0], [0, 0, 1, 0], [], []>} : vector<14x32xbf16>, vector<8x32xbf16>, vector<14x8xf32> -> vector<14x8xf32>
    %cst_48 = arith.constant dense<0.000000e+00> : vector<14x48xf32>
    %57 = tpu.matmul %45, %48, %cst_48 {dimension_numbers = #tpu.dot_dimension_numbers<[1], [1], [0], [0], [0, 0, 1, 0], [], []>} : vector<14x32xbf16>, vector<48x32xbf16>, vector<14x48xf32> -> vector<14x48xf32>
    %cst_49 = arith.constant 0.000000e+00 : f32
    %58 = vector.broadcast %cst_49 : f32 to vector<14x24xf32>
    %59 = arith.cmpf ogt, %52, %58 : vector<14x24xf32>
    %cst_50 = arith.constant -1.000000e+30 : f32
    %60 = vector.broadcast %cst_50 : f32 to vector<14x24xf32>
    %61 = arith.select %59, %55, %60 : vector<14x24xi1>, vector<14x24xf32>
    %cst_51 = arith.constant dense<0xFF800000> : vector<14xf32>
    %62 = vector.multi_reduction <maximumf>, %61, %cst_51 [1] : vector<14x24xf32> to vector<14xf32>
    %63 = vector.shape_cast %62 : vector<14xf32> to vector<14x1xf32>
    %cst_52 = arith.constant 0.000000e+00 : f32
    %64 = vector.broadcast %cst_52 : f32 to vector<14x24xf32>
    %65 = arith.cmpf ogt, %52, %64 : vector<14x24xf32>
    %66 = vector.broadcast %63 : vector<14x1xf32> to vector<14x24xf32>
    %67 = arith.subf %61, %66 : vector<14x24xf32>
    %68 = math.exp %67 : vector<14x24xf32>
    %cst_53 = arith.constant 0.000000e+00 : f32
    %69 = vector.broadcast %cst_53 : f32 to vector<14x24xf32>
    %70 = arith.select %65, %68, %69 : vector<14x24xi1>, vector<14x24xf32>
    %cst_54 = arith.constant dense<0.000000e+00> : vector<14xf32>
    %71 = vector.multi_reduction <add>, %70, %cst_54 [1] : vector<14x24xf32> to vector<14xf32>
    %72 = vector.shape_cast %71 : vector<14xf32> to vector<14x1xf32>
    %cst_55 = arith.constant 1.000000e-30 : f32
    %73 = vector.broadcast %cst_55 : f32 to vector<14x1xf32>
    %74 = arith.maximumf %72, %73 : vector<14x1xf32>
    %75 = tpu.reciprocal %74 {approx = true} : vector<14x1xf32> -> vector<14x1xf32>
    %76 = vector.broadcast %75 : vector<14x1xf32> to vector<14x24xf32>
    %77 = arith.mulf %70, %76 : vector<14x24xf32>
    %cst_56 = arith.constant 0.000000e+00 : f32
    %78 = vector.broadcast %cst_56 : f32 to vector<14x8xf32>
    %79 = arith.cmpf ogt, %53, %78 : vector<14x8xf32>
    %cst_57 = arith.constant -1.000000e+30 : f32
    %80 = vector.broadcast %cst_57 : f32 to vector<14x8xf32>
    %81 = arith.select %79, %56, %80 : vector<14x8xi1>, vector<14x8xf32>
    %cst_58 = arith.constant dense<0xFF800000> : vector<14xf32>
    %82 = vector.multi_reduction <maximumf>, %81, %cst_58 [1] : vector<14x8xf32> to vector<14xf32>
    %83 = vector.shape_cast %82 : vector<14xf32> to vector<14x1xf32>
    %cst_59 = arith.constant 0.000000e+00 : f32
    %84 = vector.broadcast %cst_59 : f32 to vector<14x8xf32>
    %85 = arith.cmpf ogt, %53, %84 : vector<14x8xf32>
    %86 = vector.broadcast %83 : vector<14x1xf32> to vector<14x8xf32>
    %87 = arith.subf %81, %86 : vector<14x8xf32>
    %88 = math.exp %87 : vector<14x8xf32>
    %cst_60 = arith.constant 0.000000e+00 : f32
    %89 = vector.broadcast %cst_60 : f32 to vector<14x8xf32>
    %90 = arith.select %85, %88, %89 : vector<14x8xi1>, vector<14x8xf32>
    %cst_61 = arith.constant dense<0.000000e+00> : vector<14xf32>
    %91 = vector.multi_reduction <add>, %90, %cst_61 [1] : vector<14x8xf32> to vector<14xf32>
    %92 = vector.shape_cast %91 : vector<14xf32> to vector<14x1xf32>
    %cst_62 = arith.constant 1.000000e-30 : f32
    %93 = vector.broadcast %cst_62 : f32 to vector<14x1xf32>
    %94 = arith.maximumf %92, %93 : vector<14x1xf32>
    %95 = tpu.reciprocal %94 {approx = true} : vector<14x1xf32> -> vector<14x1xf32>
    %96 = vector.broadcast %95 : vector<14x1xf32> to vector<14x8xf32>
    %97 = arith.mulf %90, %96 : vector<14x8xf32>
    %cst_63 = arith.constant 0.000000e+00 : f32
    %98 = vector.broadcast %cst_63 : f32 to vector<14x48xf32>
    %99 = arith.cmpf ogt, %54, %98 : vector<14x48xf32>
    %cst_64 = arith.constant -1.000000e+30 : f32
    %100 = vector.broadcast %cst_64 : f32 to vector<14x48xf32>
    %101 = arith.select %99, %57, %100 : vector<14x48xi1>, vector<14x48xf32>
    %cst_65 = arith.constant dense<0xFF800000> : vector<14xf32>
    %102 = vector.multi_reduction <maximumf>, %101, %cst_65 [1] : vector<14x48xf32> to vector<14xf32>
    %103 = vector.shape_cast %102 : vector<14xf32> to vector<14x1xf32>
    %cst_66 = arith.constant 0.000000e+00 : f32
    %104 = vector.broadcast %cst_66 : f32 to vector<14x48xf32>
    %105 = arith.cmpf ogt, %54, %104 : vector<14x48xf32>
    %106 = vector.broadcast %103 : vector<14x1xf32> to vector<14x48xf32>
    %107 = arith.subf %101, %106 : vector<14x48xf32>
    %108 = math.exp %107 : vector<14x48xf32>
    %cst_67 = arith.constant 0.000000e+00 : f32
    %109 = vector.broadcast %cst_67 : f32 to vector<14x48xf32>
    %110 = arith.select %105, %108, %109 : vector<14x48xi1>, vector<14x48xf32>
    %cst_68 = arith.constant dense<0.000000e+00> : vector<14xf32>
    %111 = vector.multi_reduction <add>, %110, %cst_68 [1] : vector<14x48xf32> to vector<14xf32>
    %112 = vector.shape_cast %111 : vector<14xf32> to vector<14x1xf32>
    %cst_69 = arith.constant 1.000000e-30 : f32
    %113 = vector.broadcast %cst_69 : f32 to vector<14x1xf32>
    %114 = arith.maximumf %112, %113 : vector<14x1xf32>
    %115 = tpu.reciprocal %114 {approx = true} : vector<14x1xf32> -> vector<14x1xf32>
    %116 = vector.broadcast %115 : vector<14x1xf32> to vector<14x48xf32>
    %117 = arith.mulf %110, %116 : vector<14x48xf32>
    %118 = arith.truncf %77 : vector<14x24xf32> to vector<14x24xbf16>
    %cst_70 = arith.constant dense<0.000000e+00> : vector<14x32xf32>
    %119 = tpu.matmul %118, %46, %cst_70 {dimension_numbers = #tpu.dot_dimension_numbers<[1], [0], [0], [1], [0, 0, 1, 1], [], []>} : vector<14x24xbf16>, vector<24x32xbf16>, vector<14x32xf32> -> vector<14x32xf32>
    %120 = arith.truncf %97 : vector<14x8xf32> to vector<14x8xbf16>
    %cst_71 = arith.constant dense<0.000000e+00> : vector<14x32xf32>
    %121 = tpu.matmul %120, %47, %cst_71 {dimension_numbers = #tpu.dot_dimension_numbers<[1], [0], [0], [1], [0, 0, 1, 1], [], []>} : vector<14x8xbf16>, vector<8x32xbf16>, vector<14x32xf32> -> vector<14x32xf32>
    %122 = arith.truncf %117 : vector<14x48xf32> to vector<14x48xbf16>
    %cst_72 = arith.constant dense<0.000000e+00> : vector<14x32xf32>
    %123 = tpu.matmul %122, %48, %cst_72 {dimension_numbers = #tpu.dot_dimension_numbers<[1], [0], [0], [1], [0, 0, 1, 1], [], []>} : vector<14x48xbf16>, vector<48x32xbf16>, vector<14x32xf32> -> vector<14x32xf32>
    %124 = tpu.concatenate %119, %121, %123, %42 in 1 : vector<14x32xf32>, vector<14x32xf32>, vector<14x32xf32>, vector<14x32xf32> -> vector<14x128xf32>
    %125 = arith.truncf %124 : vector<14x128xf32> to vector<14x128xbf16>
    %c0_73 = arith.constant 0 : index
    %c0_74 = arith.constant 0 : index
    %126 = vector.load %arg13[%c0_73, %c0_74] : memref<128x32xbf16, #tpu.memory_space<vmem>>, vector<128x32xbf16>
    %cst_75 = arith.constant dense<0.000000e+00> : vector<14x32xf32>
    %127 = tpu.matmul %125, %126, %cst_75 {dimension_numbers = #tpu.dot_dimension_numbers<[1], [0], [0], [1], [0, 0, 1, 1], [], []>} : vector<14x128xbf16>, vector<128x32xbf16>, vector<14x32xf32> -> vector<14x32xf32>
    %c0_76 = arith.constant 0 : index
    %c0_77 = arith.constant 0 : index
    %128 = vector.load %arg18[%c0_76, %c0_77] : memref<1x32xf32, #tpu.memory_space<vmem>>, vector<1x32xf32>
    %129 = vector.broadcast %128 : vector<1x32xf32> to vector<14x32xf32>
    %130 = arith.addf %127, %129 : vector<14x32xf32>
    %131 = math.tanh %130 : vector<14x32xf32>
    %c0_78 = arith.constant 0 : index
    %c0_79 = arith.constant 0 : index
    %c0_80 = arith.constant 0 : index
    %132 = vector.load %arg19[%c0_78, %c0_79, %c0_80] : memref<1x14x32xf32, #tpu.memory_space<vmem>>, vector<1x14x32xf32>
    %133 = vector.shape_cast %132 : vector<1x14x32xf32> to vector<14x32xf32>
    %134 = vector.shape_cast %131 : vector<14x32xf32> to vector<1x14x32xf32>
    tpu.vector_store %arg19[%c0_78, %c0_79, %c0_80], %134 {strides = array<i32>} : memref<1x14x32xf32, #tpu.memory_space<vmem>>, vector<1x14x32xf32>,
    %135 = vector.extract_strided_slice %77 {offsets = [0, 0], sizes = [14, 12], strides = [1, 1]} : vector<14x24xf32> to vector<14x12xf32>
    %136 = vector.extract_strided_slice %29 {offsets = [0, 0], sizes = [14, 1], strides = [1, 1]} : vector<14x2xf32> to vector<14x1xf32>
    %137 = vector.broadcast %136 : vector<14x1xf32> to vector<14x12xf32>
    %138 = arith.mulf %135, %137 : vector<14x12xf32>
    %139 = vector.extract_strided_slice %77 {offsets = [0, 12], sizes = [14, 12], strides = [1, 1]} : vector<14x24xf32> to vector<14x12xf32>
    %140 = vector.extract_strided_slice %29 {offsets = [0, 1], sizes = [14, 1], strides = [1, 1]} : vector<14x2xf32> to vector<14x1xf32>
    %141 = vector.broadcast %140 : vector<14x1xf32> to vector<14x12xf32>
    %142 = arith.mulf %139, %141 : vector<14x12xf32>
    %143 = arith.addf %138, %142 : vector<14x12xf32>
    %144 = vector.extract_strided_slice %97 {offsets = [0, 0], sizes = [14, 4], strides = [1, 1]} : vector<14x8xf32> to vector<14x4xf32>
    %145 = vector.extract_strided_slice %29 {offsets = [0, 0], sizes = [14, 1], strides = [1, 1]} : vector<14x2xf32> to vector<14x1xf32>
    %146 = vector.broadcast %145 : vector<14x1xf32> to vector<14x4xf32>
    %147 = arith.mulf %144, %146 : vector<14x4xf32>
    %148 = vector.extract_strided_slice %97 {offsets = [0, 4], sizes = [14, 4], strides = [1, 1]} : vector<14x8xf32> to vector<14x4xf32>
    %149 = vector.extract_strided_slice %29 {offsets = [0, 1], sizes = [14, 1], strides = [1, 1]} : vector<14x2xf32> to vector<14x1xf32>
    %150 = vector.broadcast %149 : vector<14x1xf32> to vector<14x4xf32>
    %151 = arith.mulf %148, %150 : vector<14x4xf32>
    %152 = arith.addf %147, %151 : vector<14x4xf32>
    %153 = vector.extract_strided_slice %117 {offsets = [0, 0], sizes = [14, 24], strides = [1, 1]} : vector<14x48xf32> to vector<14x24xf32>
    %154 = vector.extract_strided_slice %29 {offsets = [0, 0], sizes = [14, 1], strides = [1, 1]} : vector<14x2xf32> to vector<14x1xf32>
    %155 = vector.broadcast %154 : vector<14x1xf32> to vector<14x24xf32>
    %156 = arith.mulf %153, %155 : vector<14x24xf32>
    %157 = vector.extract_strided_slice %117 {offsets = [0, 24], sizes = [14, 24], strides = [1, 1]} : vector<14x48xf32> to vector<14x24xf32>
    %158 = vector.extract_strided_slice %29 {offsets = [0, 1], sizes = [14, 1], strides = [1, 1]} : vector<14x2xf32> to vector<14x1xf32>
    %159 = vector.broadcast %158 : vector<14x1xf32> to vector<14x24xf32>
    %160 = arith.mulf %157, %159 : vector<14x24xf32>
    %161 = arith.addf %156, %160 : vector<14x24xf32>
    %162 = tpu.concatenate %143, %152, %161 in 1 : vector<14x12xf32>, vector<14x4xf32>, vector<14x24xf32> -> vector<14x40xf32>
    %c0_81 = arith.constant 0 : index
    %c0_82 = arith.constant 0 : index
    %c0_83 = arith.constant 0 : index
    %163 = vector.load %arg20[%c0_81, %c0_82, %c0_83] : memref<1x14x40xf32, #tpu.memory_space<vmem>>, vector<1x14x40xf32>
    %164 = vector.shape_cast %163 : vector<1x14x40xf32> to vector<14x40xf32>
    %165 = vector.shape_cast %162 : vector<14x40xf32> to vector<1x14x40xf32>
    tpu.vector_store %arg20[%c0_81, %c0_82, %c0_83], %165 {strides = array<i32>} : memref<1x14x40xf32, #tpu.memory_space<vmem>>, vector<1x14x40xf32>,
    return
  }
  func.func @transform_0(%arg0: i32) -> (i32, i32, i32) {
    %c0_i32 = arith.constant 0 : i32
    %c0_i32_0 = arith.constant 0 : i32
    %c0_i32_1 = arith.constant 0 : i32
    return %arg0, %c0_i32, %c0_i32_0 : i32, i32, i32
  }
  func.func @transform_1(%arg0: i32) -> (i32, i32, i32) {
    %c0_i32 = arith.constant 0 : i32
    %c0_i32_0 = arith.constant 0 : i32
    %c0_i32_1 = arith.constant 0 : i32
    return %arg0, %c0_i32, %c0_i32_0 : i32, i32, i32
  }
  func.func @transform_2(%arg0: i32) -> (i32, i32, i32) {
    %c0_i32 = arith.constant 0 : i32
    %c0_i32_0 = arith.constant 0 : i32
    %c0_i32_1 = arith.constant 0 : i32
    return %arg0, %c0_i32, %c0_i32_0 : i32, i32, i32
  }
  func.func @transform_3(%arg0: i32) -> (i32, i32, i32) {
    %c0_i32 = arith.constant 0 : i32
    %c0_i32_0 = arith.constant 0 : i32
    %c0_i32_1 = arith.constant 0 : i32
    return %arg0, %c0_i32, %c0_i32_0 : i32, i32, i32
  }
  func.func @transform_4(%arg0: i32) -> (i32, i32, i32) {
    %c0_i32 = arith.constant 0 : i32
    %c0_i32_0 = arith.constant 0 : i32
    %c0_i32_1 = arith.constant 0 : i32
    return %arg0, %c0_i32, %c0_i32_0 : i32, i32, i32
  }
  func.func @transform_5(%arg0: i32) -> (i32, i32, i32) {
    %c0_i32 = arith.constant 0 : i32
    %c0_i32_0 = arith.constant 0 : i32
    %c0_i32_1 = arith.constant 0 : i32
    return %arg0, %c0_i32, %c0_i32_0 : i32, i32, i32
  }
  func.func @transform_6(%arg0: i32) -> (i32, i32) {
    %c0_i32 = arith.constant 0 : i32
    %c0_i32_0 = arith.constant 0 : i32
    %c0_i32_1 = arith.constant 0 : i32
    return %c0_i32, %c0_i32_0 : i32, i32
  }
  func.func @transform_7(%arg0: i32) -> (i32, i32) {
    %c0_i32 = arith.constant 0 : i32
    %c0_i32_0 = arith.constant 0 : i32
    %c0_i32_1 = arith.constant 0 : i32
    return %c0_i32, %c0_i32_0 : i32, i32
  }
  func.func @transform_8(%arg0: i32) -> (i32, i32) {
    %c0_i32 = arith.constant 0 : i32
    %c0_i32_0 = arith.constant 0 : i32
    %c0_i32_1 = arith.constant 0 : i32
    return %c0_i32, %c0_i32_0 : i32, i32
  }
  func.func @transform_9(%arg0: i32) -> (i32, i32) {
    %c0_i32 = arith.constant 0 : i32
    %c0_i32_0 = arith.constant 0 : i32
    %c0_i32_1 = arith.constant 0 : i32
    return %c0_i32, %c0_i32_0 : i32, i32
  }
  func.func @transform_10(%arg0: i32) -> (i32, i32) {
    %c0_i32 = arith.constant 0 : i32
    %c0_i32_0 = arith.constant 0 : i32
    %c0_i32_1 = arith.constant 0 : i32
    return %c0_i32, %c0_i32_0 : i32, i32
  }
  func.func @transform_11(%arg0: i32) -> (i32, i32) {
    %c0_i32 = arith.constant 0 : i32
    %c0_i32_0 = arith.constant 0 : i32
    %c0_i32_1 = arith.constant 0 : i32
    return %c0_i32, %c0_i32_0 : i32, i32
  }
  func.func @transform_12(%arg0: i32) -> (i32, i32) {
    %c0_i32 = arith.constant 0 : i32
    %c0_i32_0 = arith.constant 0 : i32
    %c0_i32_1 = arith.constant 0 : i32
    return %c0_i32, %c0_i32_0 : i32, i32
  }
  func.func @transform_13(%arg0: i32) -> (i32, i32) {
    %c0_i32 = arith.constant 0 : i32
    %c0_i32_0 = arith.constant 0 : i32
    %c0_i32_1 = arith.constant 0 : i32
    return %c0_i32, %c0_i32_0 : i32, i32
  }
  func.func @transform_14(%arg0: i32) -> (i32, i32) {
    %c0_i32 = arith.constant 0 : i32
    %c0_i32_0 = arith.constant 0 : i32
    %c0_i32_1 = arith.constant 0 : i32
    return %c0_i32, %c0_i32_0 : i32, i32
  }
  func.func @transform_15(%arg0: i32) -> (i32, i32) {
    %c0_i32 = arith.constant 0 : i32
    %c0_i32_0 = arith.constant 0 : i32
    %c0_i32_1 = arith.constant 0 : i32
    return %c0_i32, %c0_i32_0 : i32, i32
  }
  func.func @transform_16(%arg0: i32) -> (i32, i32) {
    %c0_i32 = arith.constant 0 : i32
    %c0_i32_0 = arith.constant 0 : i32
    %c0_i32_1 = arith.constant 0 : i32
    return %c0_i32, %c0_i32_0 : i32, i32
  }
  func.func @transform_17(%arg0: i32) -> (i32, i32) {
    %c0_i32 = arith.constant 0 : i32
    %c0_i32_0 = arith.constant 0 : i32
    %c0_i32_1 = arith.constant 0 : i32
    return %c0_i32, %c0_i32_0 : i32, i32
  }
  func.func @transform_18(%arg0: i32) -> (i32, i32, i32) {
    %c0_i32 = arith.constant 0 : i32
    %c0_i32_0 = arith.constant 0 : i32
    %c0_i32_1 = arith.constant 0 : i32
    return %arg0, %c0_i32, %c0_i32_0 : i32, i32, i32
  }
  func.func @transform_19(%arg0: i32) -> (i32, i32, i32) {
    %c0_i32 = arith.constant 0 : i32
    %c0_i32_0 = arith.constant 0 : i32
    %c0_i32_1 = arith.constant 0 : i32
    return %arg0, %c0_i32, %c0_i32_0 : i32, i32, i32
  }
}

</mosaic_0001>

<llo_original>
// kernel: mem_model_forward.1
$region0: #{mem_model_forward.1}
  #allocation0 [shape = 'u32[]', space=smem, size = 0x4, offset = 0x4, fixed_abs, tag = 'smem constant byte address 0x4 - core index']
  #allocation1 [shape = 'u32[144,128]{1,0:T(1,128)}', space=vmem, size = 0x12000, scoped, tag = 'internal scratch']
  %s0 = inlined_call_operand.vmem [shape: bf16[2,24,16], index: 0, kind: input, shape index: {}]
  %s1 = inlined_call_operand.vmem [shape: bf16[2,48,16], index: 1, kind: input, shape index: {}]
  %s2 = inlined_call_operand.vmem [shape: bf16[2,14,16], index: 2, kind: input, shape index: {}]
  %s3 = inlined_call_operand.vmem [shape: f32[2,2,80], index: 3, kind: input, shape index: {}]
  %s4 = inlined_call_operand.vmem [shape: f32[2,2,24], index: 4, kind: input, shape index: {}]
  %s5 = inlined_call_operand.vmem [shape: f32[2,8,48], index: 5, kind: input, shape index: {}]
  %s6 = inlined_call_operand.vmem [shape: f32[14,2], index: 6, kind: input, shape index: {}]
  %s7 = inlined_call_operand.vmem [shape: bf16[16,32], index: 7, kind: input, shape index: {}]
  %s8 = inlined_call_operand.vmem [shape: bf16[16,32], index: 8, kind: input, shape index: {}]
  %s9 = inlined_call_operand.vmem [shape: bf16[32,32], index: 9, kind: input, shape index: {}]
  %s10 = inlined_call_operand.vmem [shape: bf16[16,32], index: 10, kind: input, shape index: {}]
  %s11 = inlined_call_operand.vmem [shape: bf16[32,32], index: 11, kind: input, shape index: {}]
  %s12 = inlined_call_operand.vmem [shape: bf16[128,32], index: 12, kind: input, shape index: {}]
  %s13 = inlined_call_operand.vmem [shape: f32[1,32], index: 13, kind: input, shape index: {}]
  %s14 = inlined_call_operand.vmem [shape: f32[1,32], index: 14, kind: input, shape index: {}]
  %s15 = inlined_call_operand.vmem [shape: f32[1,32], index: 15, kind: input, shape index: {}]
  %s16 = inlined_call_operand.vmem [shape: f32[1,32], index: 16, kind: input, shape index: {}]
  %s17 = inlined_call_operand.vmem [shape: f32[1,32], index: 17, kind: input, shape index: {}]
  %s18 = inlined_call_operand.vmem [shape: f32[2,14,32], index: 18, kind: output, shape index: {0}]
  %s19 = inlined_call_operand.vmem [shape: f32[2,14,40], index: 19, kind: output, shape index: {1}]
  %20 = xla_tuple %s18, %s19
  %s21 = sld [smem:[#allocation0]]
  $region113: #{mem_model_forward.1} parent=0
    _
  %s23 = ssub.s32 1, %s21
  %s24 = scalar_select 0, %s23, %s21
  loop: start=0, step=1, limit=4
  $region2: #{mem_model_forward.1} parent=0 // loop_pre_header
    _
  $region3: #{mem_model_forward.1} parent=0 // loop_header
    %s26 = sphi 0, %s30
    %p27 = scmp.ge.s32.totalorder %s26, 4
    %s36 = sphi 0, %s38
    %s39 = sphi 0, %s36
    %s40 = sphi 0, %s39
    %s56 = sphi 0, %s40
    %s62 = sphi 0, %s64
    %s65 = sphi 0, %s62
    %s66 = sphi 0, %s65
    %s82 = sphi 0, %s66
    %s88 = sphi 0, %s90
    %s91 = sphi 0, %s88
    %s92 = sphi 0, %s91
    %s108 = sphi 0, %s92
    %s114 = sphi 0, %s116
    %s117 = sphi 0, %s114
    %s118 = sphi 0, %s117
    %s134 = sphi 0, %s118
    %s140 = sphi 0, %s142
    %s143 = sphi 0, %s140
    %s144 = sphi 0, %s143
    %s160 = sphi 0, %s144
    %s166 = sphi 0, %s168
    %s169 = sphi 0, %s166
    %s170 = sphi 0, %s169
    %s186 = sphi 0, %s170
    %s190 = sphi 0, %s190
    %s192 = sphi 0, %s190
    %s193 = sphi 0, %s192
    %s207 = sphi 0, %s193
    %s211 = sphi 0, %s211
    %s213 = sphi 0, %s211
    %s214 = sphi 0, %s213
    %s228 = sphi 0, %s214
    %s232 = sphi 0, %s232
    %s234 = sphi 0, %s232
    %s235 = sphi 0, %s234
    %s249 = sphi 0, %s235
    %s253 = sphi 0, %s253
    %s255 = sphi 0, %s253
    %s256 = sphi 0, %s255
    %s270 = sphi 0, %s256
    %s274 = sphi 0, %s274
    %s276 = sphi 0, %s274
    %s277 = sphi 0, %s276
    %s291 = sphi 0, %s277
    %s295 = sphi 0, %s295
    %s297 = sphi 0, %s295
    %s298 = sphi 0, %s297
    %s312 = sphi 0, %s298
    %s316 = sphi 0, %s316
    %s318 = sphi 0, %s316
    %s319 = sphi 0, %s318
    %s333 = sphi 0, %s319
    %s337 = sphi 0, %s337
    %s339 = sphi 0, %s337
    %s340 = sphi 0, %s339
    %s354 = sphi 0, %s340
    %s358 = sphi 0, %s358
    %s360 = sphi 0, %s358
    %s361 = sphi 0, %s360
    %s375 = sphi 0, %s361
    %s379 = sphi 0, %s379
    %s381 = sphi 0, %s379
    %s382 = sphi 0, %s381
    %s396 = sphi 0, %s382
    %s400 = sphi 0, %s400
    %s402 = sphi 0, %s400
    %s403 = sphi 0, %s402
    %s417 = sphi 0, %s403
    %s421 = sphi 0, %s421
    %s423 = sphi 0, %s421
    %s424 = sphi 0, %s423
    %s438 = sphi 0, %s424
    %s444 = sphi 0, %s446
    %s447 = sphi 0, %s444
    %s448 = sphi 0, %s447
    %s464 = sphi 0, %s448
    %s470 = sphi 0, %s472
    %s473 = sphi 0, %s470
    %s474 = sphi 0, %s473
    %s490 = sphi 0, %s474
  $region4: #{mem_model_forward.1} parent=0 // loop_header_branch
    %29 = sbr.rel (%p27) target = $region8
  $region5: #{mem_model_forward.1} parent=0 // loop_body
    %s31 = ssub.s32 %s26, 1
    %s32 = ssub.s32 %s26, 2
    %s33 = sadd.s32 %s26, 1
    %s34 = ssub.s32 %s26, %s33
    %p35 = scmp.eq.s32.totalorder %s34, 0
    %s37 = sadd.s32 %s36, 1
    %s38 = scalar_select %p35, %s36, %s37
    %p41 = pneg %p35
    %p42 = scmp.eq.s32.totalorder %s26, 1
    %p43 = por %p41, %p42
    %p44 = scmp.ne.s32.totalorder %s36, %s39
    %p45 = scmp.eq.s32.totalorder %s26, 0
    %p46 = por %p44, %p45
    %p47 = scmp.ne.s32.totalorder %s36, %s39
    %p48 = scmp.eq.s32.totalorder %s31, 1
    %p49 = por %p47, %p48
    %p50 = scmp.ne.s32.totalorder %s39, %s40
    %p51 = scmp.eq.s32.totalorder %s31, 0
    %p52 = por %p50, %p51
    %p53 = scmp.ne.s32.totalorder %s39, %s40
    %p54 = scmp.eq.s32.totalorder %s32, 1
    %p55 = por %p53, %p54
    %p57 = scmp.ne.s32.totalorder %s40, %s56
    %p58 = scmp.eq.s32.totalorder %s32, 0
    %p59 = por %p57, %p58
    %s60 = ssub.s32 %s26, %s33
    %p61 = scmp.eq.s32.totalorder %s60, 0
    %s63 = sadd.s32 %s62, 1
    %s64 = scalar_select %p61, %s62, %s63
    %p67 = pneg %p61
    %p68 = scmp.eq.s32.totalorder %s26, 1
    %p69 = por %p67, %p68
    %p70 = scmp.ne.s32.totalorder %s62, %s65
    %p71 = scmp.eq.s32.totalorder %s26, 0
    %p72 = por %p70, %p71
    %p73 = scmp.ne.s32.totalorder %s62, %s65
    %p74 = scmp.eq.s32.totalorder %s31, 1
    %p75 = por %p73, %p74
    %p76 = scmp.ne.s32.totalorder %s65, %s66
    %p77 = scmp.eq.s32.totalorder %s31, 0
    %p78 = por %p76, %p77
    %p79 = scmp.ne.s32.totalorder %s65, %s66
    %p80 = scmp.eq.s32.totalorder %s32, 1
    %p81 = por %p79, %p80
    %p83 = scmp.ne.s32.totalorder %s66, %s82
    %p84 = scmp.eq.s32.totalorder %s32, 0
    %p85 = por %p83, %p84
    %s86 = ssub.s32 %s26, %s33
    %p87 = scmp.eq.s32.totalorder %s86, 0
    %s89 = sadd.s32 %s88, 1
    %s90 = scalar_select %p87, %s88, %s89
    %p93 = pneg %p87
    %p94 = scmp.eq.s32.totalorder %s26, 1
    %p95 = por %p93, %p94
    %p96 = scmp.ne.s32.totalorder %s88, %s91
    %p97 = scmp.eq.s32.totalorder %s26, 0
    %p98 = por %p96, %p97
    %p99 = scmp.ne.s32.totalorder %s88, %s91
    %p100 = scmp.eq.s32.totalorder %s31, 1
    %p101 = por %p99, %p100
    %p102 = scmp.ne.s32.totalorder %s91, %s92
    %p103 = scmp.eq.s32.totalorder %s31, 0
    %p104 = por %p102, %p103
    %p105 = scmp.ne.s32.totalorder %s91, %s92
    %p106 = scmp.eq.s32.totalorder %s32, 1
    %p107 = por %p105, %p106
    %p109 = scmp.ne.s32.totalorder %s92, %s108
    %p110 = scmp.eq.s32.totalorder %s32, 0
    %p111 = por %p109, %p110
    %s112 = ssub.s32 %s26, %s33
    %p113 = scmp.eq.s32.totalorder %s112, 0
    %s115 = sadd.s32 %s114, 1
    %s116 = scalar_select %p113, %s114, %s115
    %p119 = pneg %p113
    %p120 = scmp.eq.s32.totalorder %s26, 1
    %p121 = por %p119, %p120
    %p122 = scmp.ne.s32.totalorder %s114, %s117
    %p123 = scmp.eq.s32.totalorder %s26, 0
    %p124 = por %p122, %p123
    %p125 = scmp.ne.s32.totalorder %s114, %s117
    %p126 = scmp.eq.s32.totalorder %s31, 1
    %p127 = por %p125, %p126
    %p128 = scmp.ne.s32.totalorder %s117, %s118
    %p129 = scmp.eq.s32.totalorder %s31, 0
    %p130 = por %p128, %p129
    %p131 = scmp.ne.s32.totalorder %s117, %s118
    %p132 = scmp.eq.s32.totalorder %s32, 1
    %p133 = por %p131, %p132
    %p135 = scmp.ne.s32.totalorder %s118, %s134
    %p136 = scmp.eq.s32.totalorder %s32, 0
    %p137 = por %p135, %p136
    %s138 = ssub.s32 %s26, %s33
    %p139 = scmp.eq.s32.totalorder %s138, 0
    %s141 = sadd.s32 %s140, 1
    %s142 = scalar_select %p139, %s140, %s141
    %p145 = pneg %p139
    %p146 = scmp.eq.s32.totalorder %s26, 1
    %p147 = por %p145, %p146
    %p148 = scmp.ne.s32.totalorder %s140, %s143
    %p149 = scmp.eq.s32.totalorder %s26, 0
    %p150 = por %p148, %p149
    %p151 = scmp.ne.s32.totalorder %s140, %s143
    %p152 = scmp.eq.s32.totalorder %s31, 1
    %p153 = por %p151, %p152
    %p154 = scmp.ne.s32.totalorder %s143, %s144
    %p155 = scmp.eq.s32.totalorder %s31, 0
    %p156 = por %p154, %p155
    %p157 = scmp.ne.s32.totalorder %s143, %s144
    %p158 = scmp.eq.s32.totalorder %s32, 1
    %p159 = por %p157, %p158
    %p161 = scmp.ne.s32.totalorder %s144, %s160
    %p162 = scmp.eq.s32.totalorder %s32, 0
    %p163 = por %p161, %p162
    %s164 = ssub.s32 %s26, %s33
    %p165 = scmp.eq.s32.totalorder %s164, 0
    %s167 = sadd.s32 %s166, 1
    %s168 = scalar_select %p165, %s166, %s167
    %p171 = pneg %p165
    %p172 = scmp.eq.s32.totalorder %s26, 1
    %p173 = por %p171, %p172
    %p174 = scmp.ne.s32.totalorder %s166, %s169
    %p175 = scmp.eq.s32.totalorder %s26, 0
    %p176 = por %p174, %p175
    %p177 = scmp.ne.s32.totalorder %s166, %s169
    %p178 = scmp.eq.s32.totalorder %s31, 1
    %p179 = por %p177, %p178
    %p180 = scmp.ne.s32.totalorder %s169, %s170
    %p181 = scmp.eq.s32.totalorder %s31, 0
    %p182 = por %p180, %p181
    %p183 = scmp.ne.s32.totalorder %s169, %s170
    %p184 = scmp.eq.s32.totalorder %s32, 1
    %p185 = por %p183, %p184
    %p187 = scmp.ne.s32.totalorder %s170, %s186
    %p188 = scmp.eq.s32.totalorder %s32, 0
    %p189 = por %p187, %p188
    %s191 = sadd.s32 %s190, 1
    %p194 = scmp.eq.s32.totalorder %s26, 1
    %p195 = scmp.ne.s32.totalorder %s190, %s192
    %p196 = scmp.eq.s32.totalorder %s26, 0
    %p197 = por %p195, %p196
    %p198 = scmp.ne.s32.totalorder %s190, %s192
    %p199 = scmp.eq.s32.totalorder %s31, 1
    %p200 = por %p198, %p199
    %p201 = scmp.ne.s32.totalorder %s192, %s193
    %p202 = scmp.eq.s32.totalorder %s31, 0
    %p203 = por %p201, %p202
    %p204 = scmp.ne.s32.totalorder %s192, %s193
    %p205 = scmp.eq.s32.totalorder %s32, 1
    %p206 = por %p204, %p205
    %p208 = scmp.ne.s32.totalorder %s193, %s207
    %p209 = scmp.eq.s32.totalorder %s32, 0
    %p210 = por %p208, %p209
    %s212 = sadd.s32 %s211, 1
    %p215 = scmp.eq.s32.totalorder %s26, 1
    %p216 = scmp.ne.s32.totalorder %s211, %s213
    %p217 = scmp.eq.s32.totalorder %s26, 0
    %p218 = por %p216, %p217
    %p219 = scmp.ne.s32.totalorder %s211, %s213
    %p220 = scmp.eq.s32.totalorder %s31, 1
    %p221 = por %p219, %p220
    %p222 = scmp.ne.s32.totalorder %s213, %s214
    %p223 = scmp.eq.s32.totalorder %s31, 0
    %p224 = por %p222, %p223
    %p225 = scmp.ne.s32.totalorder %s213, %s214
    %p226 = scmp.eq.s32.totalorder %s32, 1
    %p227 = por %p225, %p226
    %p229 = scmp.ne.s32.totalorder %s214, %s228
    %p230 = scmp.eq.s32.totalorder %s32, 0
    %p231 = por %p229, %p230
    %s233 = sadd.s32 %s232, 1
    %p236 = scmp.eq.s32.totalorder %s26, 1
    %p237 = scmp.ne.s32.totalorder %s232, %s234
    %p238 = scmp.eq.s32.totalorder %s26, 0
    %p239 = por %p237, %p238
    %p240 = scmp.ne.s32.totalorder %s232, %s234
    %p241 = scmp.eq.s32.totalorder %s31, 1
    %p242 = por %p240, %p241
    %p243 = scmp.ne.s32.totalorder %s234, %s235
    %p244 = scmp.eq.s32.totalorder %s31, 0
    %p245 = por %p243, %p244
    %p246 = scmp.ne.s32.totalorder %s234, %s235
    %p247 = scmp.eq.s32.totalorder %s32, 1
    %p248 = por %p246, %p247
    %p250 = scmp.ne.s32.totalorder %s235, %s249
    %p251 = scmp.eq.s32.totalorder %s32, 0
    %p252 = por %p250, %p251
    %s254 = sadd.s32 %s253, 1
    %p257 = scmp.eq.s32.totalorder %s26, 1
    %p258 = scmp.ne.s32.totalorder %s253, %s255
    %p259 = scmp.eq.s32.totalorder %s26, 0
    %p260 = por %p258, %p259
    %p261 = scmp.ne.s32.totalorder %s253, %s255
    %p262 = scmp.eq.s32.totalorder %s31, 1
    %p263 = por %p261, %p262
    %p264 = scmp.ne.s32.totalorder %s255, %s256
    %p265 = scmp.eq.s32.totalorder %s31, 0
    %p266 = por %p264, %p265
    %p267 = scmp.ne.s32.totalorder %s255, %s256
    %p268 = scmp.eq.s32.totalorder %s32, 1
    %p269 = por %p267, %p268
    %p271 = scmp.ne.s32.totalorder %s256, %s270
    %p272 = scmp.eq.s32.totalorder %s32, 0
    %p273 = por %p271, %p272
    %s275 = sadd.s32 %s274, 1
    %p278 = scmp.eq.s32.totalorder %s26, 1
    %p279 = scmp.ne.s32.totalorder %s274, %s276
    %p280 = scmp.eq.s32.totalorder %s26, 0
    %p281 = por %p279, %p280
    %p282 = scmp.ne.s32.totalorder %s274, %s276
    %p283 = scmp.eq.s32.totalorder %s31, 1
    %p284 = por %p282, %p283
    %p285 = scmp.ne.s32.totalorder %s276, %s277
    %p286 = scmp.eq.s32.totalorder %s31, 0
    %p287 = por %p285, %p286
    %p288 = scmp.ne.s32.totalorder %s276, %s277
    %p289 = scmp.eq.s32.totalorder %s32, 1
    %p290 = por %p288, %p289
    %p292 = scmp.ne.s32.totalorder %s277, %s291
    %p293 = scmp.eq.s32.totalorder %s32, 0
    %p294 = por %p292, %p293
    %s296 = sadd.s32 %s295, 1
    %p299 = scmp.eq.s32.totalorder %s26, 1
    %p300 = scmp.ne.s32.totalorder %s295, %s297
    %p301 = scmp.eq.s32.totalorder %s26, 0
    %p302 = por %p300, %p301
    %p303 = scmp.ne.s32.totalorder %s295, %s297
    %p304 = scmp.eq.s32.totalorder %s31, 1
    %p305 = por %p303, %p304
    %p306 = scmp.ne.s32.totalorder %s297, %s298
    %p307 = scmp.eq.s32.totalorder %s31, 0
    %p308 = por %p306, %p307
    %p309 = scmp.ne.s32.totalorder %s297, %s298
    %p310 = scmp.eq.s32.totalorder %s32, 1
    %p311 = por %p309, %p310
    %p313 = scmp.ne.s32.totalorder %s298, %s312
    %p314 = scmp.eq.s32.totalorder %s32, 0
    %p315 = por %p313, %p314
    %s317 = sadd.s32 %s316, 1
    %p320 = scmp.eq.s32.totalorder %s26, 1
    %p321 = scmp.ne.s32.totalorder %s316, %s318
    %p322 = scmp.eq.s32.totalorder %s26, 0
    %p323 = por %p321, %p322
    %p324 = scmp.ne.s32.totalorder %s316, %s318
    %p325 = scmp.eq.s32.totalorder %s31, 1
    %p326 = por %p324, %p325
    %p327 = scmp.ne.s32.totalorder %s318, %s319
    %p328 = scmp.eq.s32.totalorder %s31, 0
    %p329 = por %p327, %p328
    %p330 = scmp.ne.s32.totalorder %s318, %s319
    %p331 = scmp.eq.s32.totalorder %s32, 1
    %p332 = por %p330, %p331
    %p334 = scmp.ne.s32.totalorder %s319, %s333
    %p335 = scmp.eq.s32.totalorder %s32, 0
    %p336 = por %p334, %p335
    %s338 = sadd.s32 %s337, 1
    %p341 = scmp.eq.s32.totalorder %s26, 1
    %p342 = scmp.ne.s32.totalorder %s337, %s339
    %p343 = scmp.eq.s32.totalorder %s26, 0
    %p344 = por %p342, %p343
    %p345 = scmp.ne.s32.totalorder %s337, %s339
    %p346 = scmp.eq.s32.totalorder %s31, 1
    %p347 = por %p345, %p346
    %p348 = scmp.ne.s32.totalorder %s339, %s340
    %p349 = scmp.eq.s32.totalorder %s31, 0
    %p350 = por %p348, %p349
    %p351 = scmp.ne.s32.totalorder %s339, %s340
    %p352 = scmp.eq.s32.totalorder %s32, 1
    %p353 = por %p351, %p352
    %p355 = scmp.ne.s32.totalorder %s340, %s354
    %p356 = scmp.eq.s32.totalorder %s32, 0
    %p357 = por %p355, %p356
    %s359 = sadd.s32 %s358, 1
    %p362 = scmp.eq.s32.totalorder %s26, 1
    %p363 = scmp.ne.s32.totalorder %s358, %s360
    %p364 = scmp.eq.s32.totalorder %s26, 0
    %p365 = por %p363, %p364
    %p366 = scmp.ne.s32.totalorder %s358, %s360
    %p367 = scmp.eq.s32.totalorder %s31, 1
    %p368 = por %p366, %p367
    %p369 = scmp.ne.s32.totalorder %s360, %s361
    %p370 = scmp.eq.s32.totalorder %s31, 0
    %p371 = por %p369, %p370
    %p372 = scmp.ne.s32.totalorder %s360, %s361
    %p373 = scmp.eq.s32.totalorder %s32, 1
    %p374 = por %p372, %p373
    %p376 = scmp.ne.s32.totalorder %s361, %s375
    %p377 = scmp.eq.s32.totalorder %s32, 0
    %p378 = por %p376, %p377
    %s380 = sadd.s32 %s379, 1
    %p383 = scmp.eq.s32.totalorder %s26, 1
    %p384 = scmp.ne.s32.totalorder %s379, %s381
    %p385 = scmp.eq.s32.totalorder %s26, 0
    %p386 = por %p384, %p385
    %p387 = scmp.ne.s32.totalorder %s379, %s381
    %p388 = scmp.eq.s32.totalorder %s31, 1
    %p389 = por %p387, %p388
    %p390 = scmp.ne.s32.totalorder %s381, %s382
    %p391 = scmp.eq.s32.totalorder %s31, 0
    %p392 = por %p390, %p391
    %p393 = scmp.ne.s32.totalorder %s381, %s382
    %p394 = scmp.eq.s32.totalorder %s32, 1
    %p395 = por %p393, %p394
    %p397 = scmp.ne.s32.totalorder %s382, %s396
    %p398 = scmp.eq.s32.totalorder %s32, 0
    %p399 = por %p397, %p398
    %s401 = sadd.s32 %s400, 1
    %p404 = scmp.eq.s32.totalorder %s26, 1
    %p405 = scmp.ne.s32.totalorder %s400, %s402
    %p406 = scmp.eq.s32.totalorder %s26, 0
    %p407 = por %p405, %p406
    %p408 = scmp.ne.s32.totalorder %s400, %s402
    %p409 = scmp.eq.s32.totalorder %s31, 1
    %p410 = por %p408, %p409
    %p411 = scmp.ne.s32.totalorder %s402, %s403
    %p412 = scmp.eq.s32.totalorder %s31, 0
    %p413 = por %p411, %p412
    %p414 = scmp.ne.s32.totalorder %s402, %s403
    %p415 = scmp.eq.s32.totalorder %s32, 1
    %p416 = por %p414, %p415
    %p418 = scmp.ne.s32.totalorder %s403, %s417
    %p419 = scmp.eq.s32.totalorder %s32, 0
    %p420 = por %p418, %p419
    %s422 = sadd.s32 %s421, 1
    %p425 = scmp.eq.s32.totalorder %s26, 1
    %p426 = scmp.ne.s32.totalorder %s421, %s423
    %p427 = scmp.eq.s32.totalorder %s26, 0
    %p428 = por %p426, %p427
    %p429 = scmp.ne.s32.totalorder %s421, %s423
    %p430 = scmp.eq.s32.totalorder %s31, 1
    %p431 = por %p429, %p430
    %p432 = scmp.ne.s32.totalorder %s423, %s424
    %p433 = scmp.eq.s32.totalorder %s31, 0
    %p434 = por %p432, %p433
    %p435 = scmp.ne.s32.totalorder %s423, %s424
    %p436 = scmp.eq.s32.totalorder %s32, 1
    %p437 = por %p435, %p436
    %p439 = scmp.ne.s32.totalorder %s424, %s438
    %p440 = scmp.eq.s32.totalorder %s32, 0
    %p441 = por %p439, %p440
    %s442 = ssub.s32 %s26, %s33
    %p443 = scmp.eq.s32.totalorder %s442, 0
    %s445 = sadd.s32 %s444, 1
    %s446 = scalar_select %p443, %s444, %s445
    %p449 = pneg %p443
    %p450 = scmp.eq.s32.totalorder %s26, 1
    %p451 = por %p449, %p450
    %p452 = scmp.ne.s32.totalorder %s444, %s447
    %p453 = scmp.eq.s32.totalorder %s26, 0
    %p454 = por %p452, %p453
    %p455 = scmp.ne.s32.totalorder %s444, %s447
    %p456 = scmp.eq.s32.totalorder %s31, 1
    %p457 = por %p455, %p456
    %p458 = scmp.ne.s32.totalorder %s447, %s448
    %p459 = scmp.eq.s32.totalorder %s31, 0
    %p460 = por %p458, %p459
    %p461 = scmp.ne.s32.totalorder %s447, %s448
    %p462 = scmp.eq.s32.totalorder %s32, 1
    %p463 = por %p461, %p462
    %p465 = scmp.ne.s32.totalorder %s448, %s464
    %p466 = scmp.eq.s32.totalorder %s32, 0
    %p467 = por %p465, %p466
    %s468 = ssub.s32 %s26, %s33
    %p469 = scmp.eq.s32.totalorder %s468, 0
    %s471 = sadd.s32 %s470, 1
    %s472 = scalar_select %p469, %s470, %s471
    %p475 = pneg %p469
    %p476 = scmp.eq.s32.totalorder %s26, 1
    %p477 = por %p475, %p476
    %p478 = scmp.ne.s32.totalorder %s470, %s473
    %p479 = scmp.eq.s32.totalorder %s26, 0
    %p480 = por %p478, %p479
    %p481 = scmp.ne.s32.totalorder %s470, %s473
    %p482 = scmp.eq.s32.totalorder %s31, 1
    %p483 = por %p481, %p482
    %p484 = scmp.ne.s32.totalorder %s473, %s474
    %p485 = scmp.eq.s32.totalorder %s31, 0
    %p486 = por %p484, %p485
    %p487 = scmp.ne.s32.totalorder %s473, %s474
    %p488 = scmp.eq.s32.totalorder %s32, 1
    %p489 = por %p487, %p488
    %p491 = scmp.ne.s32.totalorder %s474, %s490
    %p492 = scmp.eq.s32.totalorder %s32, 0
    %p493 = por %p491, %p492
    %p494 = scmp.le.s32.totalorder 1, %s26
    %p495 = scmp.lt.s32.totalorder %s26, 3
    %p496 = pnand %p494, %p495
    %p497 = pneg %p496
    // Predicated region
    $region9: #{mem_model_forward.1} parent=5 // pred_check
      _
    $region10: #{mem_model_forward.1} parent=5 // pred_check_branch
      %499 = sbr.rel (%p496) target = $region12
    $region11: #{mem_model_forward.1} parent=5 // pred_region
      %s500 = ssub.s32 %s26, 1
      // Predicated region
      $region13: #{mem_model_forward.1} parent=11 // pred_check
        %p501 = pneg %p203
      $region14: #{mem_model_forward.1} parent=11 // pred_check_branch
        %503 = sbr.rel (%p501) target = $region16
      $region15: #{mem_model_forward.1} parent=11 // pred_region
        _
      $region16: #{mem_model_forward.1} parent=11 // pred_fallthru
        _
      // Predicated region
      $region17: #{mem_model_forward.1} parent=11 // pred_check
        %p504 = pneg %p224
      $region18: #{mem_model_forward.1} parent=11 // pred_check_branch
        %506 = sbr.rel (%p504) target = $region20
      $region19: #{mem_model_forward.1} parent=11 // pred_region
        _
      $region20: #{mem_model_forward.1} parent=11 // pred_fallthru
        _
      // Predicated region
      $region21: #{mem_model_forward.1} parent=11 // pred_check
        %p507 = pneg %p245
      $region22: #{mem_model_forward.1} parent=11 // pred_check_branch
        %509 = sbr.rel (%p507) target = $region24
      $region23: #{mem_model_forward.1} parent=11 // pred_region
        _
      $region24: #{mem_model_forward.1} parent=11 // pred_fallthru
        _
      // Predicated region
      $region25: #{mem_model_forward.1} parent=11 // pred_check
        %p510 = pneg %p266
      $region26: #{mem_model_forward.1} parent=11 // pred_check_branch
        %512 = sbr.rel (%p510) target = $region28
      $region27: #{mem_model_forward.1} parent=11 // pred_region
        _
      $region28: #{mem_model_forward.1} parent=11 // pred_fallthru
        _
      // Predicated region
      $region29: #{mem_model_forward.1} parent=11 // pred_check
        %p513 = pneg %p287
      $region30: #{mem_model_forward.1} parent=11 // pred_check_branch
        %515 = sbr.rel (%p513) target = $region32
      $region31: #{mem_model_forward.1} parent=11 // pred_region
        _
      $region32: #{mem_model_forward.1} parent=11 // pred_fallthru
        _
      // Predicated region
      $region33: #{mem_model_forward.1} parent=11 // pred_check
        %p516 = pneg %p308
      $region34: #{mem_model_forward.1} parent=11 // pred_check_branch
        %518 = sbr.rel (%p516) target = $region36
      $region35: #{mem_model_forward.1} parent=11 // pred_region
        _
      $region36: #{mem_model_forward.1} parent=11 // pred_fallthru
        _
      // Predicated region
      $region37: #{mem_model_forward.1} parent=11 // pred_check
        %p519 = pneg %p329
      $region38: #{mem_model_forward.1} parent=11 // pred_check_branch
        %521 = sbr.rel (%p519) target = $region40
      $region39: #{mem_model_forward.1} parent=11 // pred_region
        _
      $region40: #{mem_model_forward.1} parent=11 // pred_fallthru
        _
      // Predicated region
      $region41: #{mem_model_forward.1} parent=11 // pred_check
        %p522 = pneg %p350
      $region42: #{mem_model_forward.1} parent=11 // pred_check_branch
        %524 = sbr.rel (%p522) target = $region44
      $region43: #{mem_model_forward.1} parent=11 // pred_region
        _
      $region44: #{mem_model_forward.1} parent=11 // pred_fallthru
        _
      // Predicated region
      $region45: #{mem_model_forward.1} parent=11 // pred_check
        %p525 = pneg %p371
      $region46: #{mem_model_forward.1} parent=11 // pred_check_branch
        %527 = sbr.rel (%p525) target = $region48
      $region47: #{mem_model_forward.1} parent=11 // pred_region
        _
      $region48: #{mem_model_forward.1} parent=11 // pred_fallthru
        _
      // Predicated region
      $region49: #{mem_model_forward.1} parent=11 // pred_check
        %p528 = pneg %p392
      $region50: #{mem_model_forward.1} parent=11 // pred_check_branch
        %530 = sbr.rel (%p528) target = $region52
      $region51: #{mem_model_forward.1} parent=11 // pred_region
        _
      $region52: #{mem_model_forward.1} parent=11 // pred_fallthru
        _
      // Predicated region
      $region53: #{mem_model_forward.1} parent=11 // pred_check
        %p531 = pneg %p413
      $region54: #{mem_model_forward.1} parent=11 // pred_check_branch
        %533 = sbr.rel (%p531) target = $region56
      $region55: #{mem_model_forward.1} parent=11 // pred_region
        _
      $region56: #{mem_model_forward.1} parent=11 // pred_fallthru
        _
      // Predicated region
      $region57: #{mem_model_forward.1} parent=11 // pred_check
        %p534 = pneg %p434
      $region58: #{mem_model_forward.1} parent=11 // pred_check_branch
        %536 = sbr.rel (%p534) target = $region60
      $region59: #{mem_model_forward.1} parent=11 // pred_region
        _
      $region60: #{mem_model_forward.1} parent=11 // pred_fallthru
        _
    $region12: #{mem_model_forward.1} parent=5 // pred_fallthru
      _
    %p537 = scmp.lt.s32.totalorder %s26, 2
    // Predicated region
    $region61: #{mem_model_forward.1} parent=5 // pred_check
      %p538 = pneg %p537
    $region62: #{mem_model_forward.1} parent=5 // pred_check_branch
      %540 = sbr.rel (%p538) target = $region64
    $region63: #{mem_model_forward.1} parent=5 // pred_region
      // Predicated region
      $region65: #{mem_model_forward.1} parent=63 // pred_check
        %p541 = pneg %p46
      $region66: #{mem_model_forward.1} parent=63 // pred_check_branch
        %543 = sbr.rel (%p541) target = $region68
      $region67: #{mem_model_forward.1} parent=63 // pred_region
        %p544 = scmp.lt.s32.totalorder %s26, 1
        %s545 = scalar_select %p544, %s26, 1
        %s546 = smul.addr %s545, 3
        %s547 = smul.addr %s546, 4
        %s548 = scalar_lea.vmem %s0, %s547
      $region68: #{mem_model_forward.1} parent=63 // pred_fallthru
        _
      // Predicated region
      $region69: #{mem_model_forward.1} parent=63 // pred_check
        %p549 = pneg %p72
      $region70: #{mem_model_forward.1} parent=63 // pred_check_branch
        %551 = sbr.rel (%p549) target = $region72
      $region71: #{mem_model_forward.1} parent=63 // pred_region
        %p552 = scmp.lt.s32.totalorder %s26, 1
        %s553 = scalar_select %p552, %s26, 1
        %s554 = smul.addr %s553, 6
        %s555 = smul.addr %s554, 4
        %s556 = scalar_lea.vmem %s1, %s555
      $region72: #{mem_model_forward.1} parent=63 // pred_fallthru
        _
      // Predicated region
      $region73: #{mem_model_forward.1} parent=63 // pred_check
        %p557 = pneg %p98
      $region74: #{mem_model_forward.1} parent=63 // pred_check_branch
        %559 = sbr.rel (%p557) target = $region76
      $region75: #{mem_model_forward.1} parent=63 // pred_region
        %p560 = scmp.lt.s32.totalorder %s26, 1
        %s561 = scalar_select %p560, %s26, 1
        %s562 = smul.addr %s561, 2
        %s563 = smul.addr %s562, 4
        %s564 = scalar_lea.vmem %s2, %s563
      $region76: #{mem_model_forward.1} parent=63 // pred_fallthru
        _
      // Predicated region
      $region77: #{mem_model_forward.1} parent=63 // pred_check
        %p565 = pneg %p124
      $region78: #{mem_model_forward.1} parent=63 // pred_check_branch
        %567 = sbr.rel (%p565) target = $region80
      $region79: #{mem_model_forward.1} parent=63 // pred_region
        %p568 = scmp.lt.s32.totalorder %s26, 1
        %s569 = scalar_select %p568, %s26, 1
        %s570 = smul.addr %s569, 2
        %s571 = scalar_lea.vmem %s3, %s570
      $region80: #{mem_model_forward.1} parent=63 // pred_fallthru
        _
      // Predicated region
      $region81: #{mem_model_forward.1} parent=63 // pred_check
        %p572 = pneg %p150
      $region82: #{mem_model_forward.1} parent=63 // pred_check_branch
        %574 = sbr.rel (%p572) target = $region84
      $region83: #{mem_model_forward.1} parent=63 // pred_region
        %p575 = scmp.lt.s32.totalorder %s26, 1
        %s576 = scalar_select %p575, %s26, 1
        %s577 = smul.addr %s576, 2
        %s578 = scalar_lea.vmem %s4, %s577
      $region84: #{mem_model_forward.1} parent=63 // pred_fallthru
        _
      // Predicated region
      $region85: #{mem_model_forward.1} parent=63 // pred_check
        %p579 = pneg %p176
      $region86: #{mem_model_forward.1} parent=63 // pred_check_branch
        %581 = sbr.rel (%p579) target = $region88
      $region87: #{mem_model_forward.1} parent=63 // pred_region
        %p582 = scmp.lt.s32.totalorder %s26, 1
        %s583 = scalar_select %p582, %s26, 1
        %s584 = smul.addr %s583, 8
        %s585 = scalar_lea.vmem %s5, %s584
      $region88: #{mem_model_forward.1} parent=63 // pred_fallthru
        _
    $region64: #{mem_model_forward.1} parent=5 // pred_fallthru
      _
    %p586 = scmp.le.s32.totalorder 1, %s26
    %p587 = scmp.lt.s32.totalorder %s26, 3
    %p588 = pnand %p586, %p587
    %p589 = pneg %p588
    // Predicated region
    $region89: #{mem_model_forward.1} parent=5 // pred_check
      _
    $region90: #{mem_model_forward.1} parent=5 // pred_check_branch
      %591 = sbr.rel (%p588) target = $region92
    $region91: #{mem_model_forward.1} parent=5 // pred_region
      %s592 = ssub.s32 %s26, 1
      %p593 = scmp.lt.s32.totalorder %s31, 1
      %s594 = scalar_select %p593, %s31, 1
      %s595 = smul.addr %s594, 3
      %s596 = smul.addr %s595, 4
      %s597 = scalar_lea.vmem %s0, %s596
      %p598 = pneg %p52
      %p599 = pneg %p49
      %p600 = scmp.lt.s32.totalorder %s31, 1
      %s601 = scalar_select %p600, %s31, 1
      %s602 = smul.addr %s601, 6
      %s603 = smul.addr %s602, 4
      %s604 = scalar_lea.vmem %s1, %s603
      %p605 = pneg %p78
      %p606 = pneg %p75
      %p607 = scmp.lt.s32.totalorder %s31, 1
      %s608 = scalar_select %p607, %s31, 1
      %s609 = smul.addr %s608, 2
      %s610 = smul.addr %s609, 4
      %s611 = scalar_lea.vmem %s2, %s610
      %p612 = pneg %p104
      %p613 = pneg %p101
      %p614 = scmp.lt.s32.totalorder %s31, 1
      %s615 = scalar_select %p614, %s31, 1
      %s616 = smul.addr %s615, 2
      %s617 = scalar_lea.vmem %s3, %s616
      %p618 = pneg %p130
      %p619 = pneg %p127
      %p620 = scmp.lt.s32.totalorder %s31, 1
      %s621 = scalar_select %p620, %s31, 1
      %s622 = smul.addr %s621, 2
      %s623 = scalar_lea.vmem %s4, %s622
      %p624 = pneg %p156
      %p625 = pneg %p153
      %p626 = scmp.lt.s32.totalorder %s31, 1
      %s627 = scalar_select %p626, %s31, 1
      %s628 = smul.addr %s627, 8
      %s629 = scalar_lea.vmem %s5, %s628
      %p630 = pneg %p182
      %p631 = pneg %p179
      %p632 = pneg %p203
      %p633 = pneg %p200
      %p634 = pneg %p224
      %p635 = pneg %p221
      %p636 = pneg %p245
      %p637 = pneg %p242
      %p638 = pneg %p266
      %p639 = pneg %p263
      %p640 = pneg %p287
      %p641 = pneg %p284
      %p642 = pneg %p308
      %p643 = pneg %p305
      %p644 = pneg %p329
      %p645 = pneg %p326
      %p646 = pneg %p350
      %p647 = pneg %p347
      %p648 = pneg %p371
      %p649 = pneg %p368
      %p650 = pneg %p392
      %p651 = pneg %p389
      %p652 = pneg %p413
      %p653 = pneg %p410
      %p654 = pneg %p434
      %p655 = pneg %p431
      %p656 = pneg %p460
      %p657 = pneg %p457
      %p658 = scmp.lt.s32.totalorder %s31, 1
      %s659 = scalar_select %p658, %s31, 1
      %s660 = smul.addr %s659, 2
      %s661 = smul.addr %s660, 8
      %s662 = scalar_lea.vmem %s18, %s661
      %p663 = pneg %p486
      %p664 = pneg %p483
      %p665 = scmp.lt.s32.totalorder %s31, 1
      %s666 = scalar_select %p665, %s31, 1
      %s667 = smul.addr %s666, 2
      %s668 = smul.addr %s667, 8
      %s669 = scalar_lea.vmem %s19, %s668
      %p670 = scmp.lt.s32.totalorder %s31, 1
      %s671 = scalar_select %p670, %s31, 1
      %s672 = smul.addr %s671, 3
      %s673 = smul.addr %s672, 4
      %s674 = scalar_lea.vmem %s0, %s673
      %p675 = scmp.lt.s32.totalorder %s31, 1
      %s676 = scalar_select %p675, %s31, 1
      %s677 = smul.addr %s676, 6
      %s678 = smul.addr %s677, 4
      %s679 = scalar_lea.vmem %s1, %s678
      %p680 = scmp.lt.s32.totalorder %s31, 1
      %s681 = scalar_select %p680, %s31, 1
      %s682 = smul.addr %s681, 2
      %s683 = smul.addr %s682, 4
      %s684 = scalar_lea.vmem %s2, %s683
      %p685 = scmp.lt.s32.totalorder %s31, 1
      %s686 = scalar_select %p685, %s31, 1
      %s687 = smul.addr %s686, 2
      %s688 = scalar_lea.vmem %s3, %s687
      %p689 = scmp.lt.s32.totalorder %s31, 1
      %s690 = scalar_select %p689, %s31, 1
      %s691 = smul.addr %s690, 2
      %s692 = scalar_lea.vmem %s4, %s691
      %p693 = scmp.lt.s32.totalorder %s31, 1
      %s694 = scalar_select %p693, %s31, 1
      %s695 = smul.addr %s694, 8
      %s696 = scalar_lea.vmem %s5, %s695
      %p697 = scmp.lt.s32.totalorder %s31, 1
      %s698 = scalar_select %p697, %s31, 1
      %s699 = smul.addr %s698, 2
      %s700 = smul.addr %s699, 8
      %s701 = scalar_lea.vmem %s18, %s700
      %p702 = scmp.lt.s32.totalorder %s31, 1
      %s703 = scalar_select %p702, %s31, 1
      %s704 = smul.addr %s703, 2
      %s705 = smul.addr %s704, 8
      %s706 = scalar_lea.vmem %s19, %s705
      %v708 = vld [vmem:[%s674] sm:$0xf]
      %v709 = vld [vmem:[%s674 + $0x4] sm:$0xf]
      %v710 = vld [vmem:[%s674 + $0x8] sm:$0xf]
      %v711 = vld [vmem:[%s7] sm:$0xf]
      %v712 = vld [vmem:[%s7 + $0x4] sm:$0xf]
      %v713 = vld [vmem:[%s13] sm:$0x1]
      %v715 = vlaneseq
      %v716 = vshrl.u32 %v715, 7
      %v717 = vsub.s32 0, %v716
      %v718 = vrot.slane %v713, %v717
      %v723 = vunpack.c.l.b16 %v708
      %v724 = vunpack.c.l.b16 %v709
      %v725 = vunpack.c.l.b16 %v710
      %v726 = vpack.c.b16 %v724, %v723
      %v727 = vpack.c.b16 %v725, %v725
      %v730 = vunpack.c.l.b16 %v711
      %v731 = vunpack.c.l.b16 %v712
      %v732 = vpack.c.b16 %v731, %v730
      %vm734 = vcmask 130048
      %v736 = vsel %vm734, %v726, 0
      %v739 = vsel %vm734, %v727, 0
      %741 = vmatprep.subr.bf16.mxu0 0
      %742 = vmatpush1.bf16.msra.mxu0 %v732
      %743 = vmatprep.subr.bf16.mxu0 0
      %744 = vmatpush1.bf16.msra.mxu0 0
      %745 = vmatprep.subr.bf16.mxu0 0
      %746 = vmatpush1.bf16.msra.mxu0 0
      %747 = vmatprep.subr.bf16.mxu0 0
      %748 = vmatpush1.bf16.msra.mxu0 0
      %749 = vmatprep.subr.bf16.mxu0 0
      %750 = vmatpush1.bf16.msra.mxu0 0
      %751 = vmatprep.subr.bf16.mxu0 0
      %752 = vmatpush1.bf16.msra.mxu0 0
      %753 = vmatprep.subr.bf16.mxu0 0
      %754 = vmatpush1.bf16.msra.mxu0 0
      %755 = vmatprep.subr.bf16.mxu0 0
      %756 = vmatpush1.bf16.msra.mxu0 0
      %757 = vmatprep.subr.bf16.mxu0 0
      %758 = vmatpush1.bf16.msra.mxu0 0
      %759 = vmatprep.subr.bf16.mxu0 0
      %760 = vmatpush1.bf16.msra.mxu0 0
      %761 = vmatprep.subr.bf16.mxu0 0
      %762 = vmatpush1.bf16.msra.mxu0 0
      %763 = vmatprep.subr.bf16.mxu0 0
      %764 = vmatpush1.bf16.msra.mxu0 0
      %765 = vmatprep.subr.bf16.mxu0 0
      %766 = vmatpush1.bf16.msra.mxu0 0
      %767 = vmatprep.subr.bf16.mxu0 0
      %768 = vmatpush1.bf16.msra.mxu0 0
      %769 = vmatprep.subr.bf16.mxu0 0
      %770 = vmatpush1.bf16.msra.mxu0 0
      %771 = vmatprep.subr.bf16.mxu0 0
      %772 = vmatpush1.bf16.msra.mxu0 0
      %773 = vmatprep.mubr.bf16.mxu0 0
      %774 = vmatmul.mubr.bf16.gmra.mrb[0].mxu0 %v736
      %v775 = vpop.f32.mrb[0].mxu0
      %v776 = vadd.f32 %v718, %v775
      %v777 = vpop.f32.mrb[0].mxu0
      %v778 = vpop.f32.mrb[0].mxu0
      %v779 = vadd.f32 %v718, %v778
      %v780 = vpop.f32.mrb[0].mxu0
      %781 = vmatprep.mubr.bf16.mxu0 0
      %782 = vmatmul.mubr.bf16.gmra.mrb[0].mxu0 %v739
      %v783 = vpop.f32.mrb[0].mxu0
      %v784 = vadd.f32 %v718, %v783
      %v785 = vpop.f32.mrb[0].mxu0
      %v786 = vpop.f32.mrb[0].mxu0
      %v787 = vpop.f32.mrb[0].mxu0
      %788 = vdwg.mxu0
      %v789 = vtanh.pop %v776
      %v790 = vtanh.pop %v779
      %v791 = vtanh.pop %v784
      %v792 = vld [vmem:[%s679] sm:$0xf]
      %v793 = vld [vmem:[%s679 + $0x4] sm:$0xf]
      %v794 = vld [vmem:[%s679 + $0x8] sm:$0xf]
      %v795 = vld [vmem:[%s679 + $0xc] sm:$0xf]
      %v796 = vld [vmem:[%s679 + $0x10] sm:$0xf]
      %v797 = vld [vmem:[%s679 + $0x14] sm:$0xf]
      %v798 = vld [vmem:[%s8] sm:$0xf]
      %v799 = vld [vmem:[%s8 + $0x4] sm:$0xf]
      %v800 = vld [vmem:[%s14] sm:$0x1]
      %v802 = vlaneseq
      %v803 = vshrl.u32 %v802, 7
      %v804 = vsub.s32 0, %v803
      %v805 = vrot.slane %v800, %v804
      %v813 = vunpack.c.l.b16 %v792
      %v814 = vunpack.c.l.b16 %v793
      %v815 = vunpack.c.l.b16 %v794
      %v816 = vunpack.c.l.b16 %v795
      %v817 = vunpack.c.l.b16 %v796
      %v818 = vunpack.c.l.b16 %v797
      %v819 = vpack.c.b16 %v814, %v813
      %v820 = vpack.c.b16 %v816, %v815
      %v821 = vpack.c.b16 %v818, %v817
      %v824 = vunpack.c.l.b16 %v798
      %v825 = vunpack.c.l.b16 %v799
      %v826 = vpack.c.b16 %v825, %v824
      %v829 = vsel %vm734, %v819, 0
      %v832 = vsel %vm734, %v820, 0
      %v835 = vsel %vm734, %v821, 0
      %837 = vmatprep.subr.bf16.mxu0 0
      %838 = vmatpush1.bf16.msra.mxu0 %v826
      %839 = vmatprep.subr.bf16.mxu0 0
      %840 = vmatpush1.bf16.msra.mxu0 0
      %841 = vmatprep.subr.bf16.mxu0 0
      %842 = vmatpush1.bf16.msra.mxu0 0
      %843 = vmatprep.subr.bf16.mxu0 0
      %844 = vmatpush1.bf16.msra.mxu0 0
      %845 = vmatprep.subr.bf16.mxu0 0
      %846 = vmatpush1.bf16.msra.mxu0 0
      %847 = vmatprep.subr.bf16.mxu0 0
      %848 = vmatpush1.bf16.msra.mxu0 0
      %849 = vmatprep.subr.bf16.mxu0 0
      %850 = vmatpush1.bf16.msra.mxu0 0
      %851 = vmatprep.subr.bf16.mxu0 0
      %852 = vmatpush1.bf16.msra.mxu0 0
      %853 = vmatprep.subr.bf16.mxu0 0
      %854 = vmatpush1.bf16.msra.mxu0 0
      %855 = vmatprep.subr.bf16.mxu0 0
      %856 = vmatpush1.bf16.msra.mxu0 0
      %857 = vmatprep.subr.bf16.mxu0 0
      %858 = vmatpush1.bf16.msra.mxu0 0
      %859 = vmatprep.subr.bf16.mxu0 0
      %860 = vmatpush1.bf16.msra.mxu0 0
      %861 = vmatprep.subr.bf16.mxu0 0
      %862 = vmatpush1.bf16.msra.mxu0 0
      %863 = vmatprep.subr.bf16.mxu0 0
      %864 = vmatpush1.bf16.msra.mxu0 0
      %865 = vmatprep.subr.bf16.mxu0 0
      %866 = vmatpush1.bf16.msra.mxu0 0
      %867 = vmatprep.subr.bf16.mxu0 0
      %868 = vmatpush1.bf16.msra.mxu0 0
      %869 = vmatprep.mubr.bf16.mxu0 0
      %870 = vmatmul.mubr.bf16.gmra.mrb[0].mxu0 %v829
      %v871 = vpop.f32.mrb[0].mxu0
      %v872 = vadd.f32 %v805, %v871
      %v873 = vpop.f32.mrb[0].mxu0
      %v874 = vpop.f32.mrb[0].mxu0
      %v875 = vadd.f32 %v805, %v874
      %v876 = vpop.f32.mrb[0].mxu0
      %877 = vmatprep.mubr.bf16.mxu0 0
      %878 = vmatmul.mubr.bf16.gmra.mrb[0].mxu0 %v832
      %v879 = vpop.f32.mrb[0].mxu0
      %v880 = vadd.f32 %v805, %v879
      %v881 = vpop.f32.mrb[0].mxu0
      %v882 = vpop.f32.mrb[0].mxu0
      %v883 = vadd.f32 %v805, %v882
      %v884 = vpop.f32.mrb[0].mxu0
      %885 = vmatprep.mubr.bf16.mxu0 0
      %886 = vmatmul.mubr.bf16.gmra.mrb[0].mxu0 %v835
      %v887 = vpop.f32.mrb[0].mxu0
      %v888 = vadd.f32 %v805, %v887
      %v889 = vpop.f32.mrb[0].mxu0
      %v890 = vpop.f32.mrb[0].mxu0
      %v891 = vadd.f32 %v805, %v890
      %v892 = vpop.f32.mrb[0].mxu0
      %893 = vdwg.mxu0
      %v894 = vtanh.pop %v872
      %v895 = vtanh.pop %v875
      %v896 = vtanh.pop %v880
      %v897 = vtanh.pop %v883
      %v898 = vtanh.pop %v888
      %v899 = vtanh.pop %v891
      %v900 = vld [vmem:[%s692] sm:$0x3]
      %vm901 = vcmask 195584
      %v903 = vsel %vm901, %v900, 0
      %905 = vmatprep.subr.mxu0 0.0
      %906 = vmatpush1.msra.mxu0 %v789
      %907 = vmatprep.subr.mxu0 0.0
      %908 = vmatpush1.msra.mxu0 %v790
      %909 = vmatprep.subr.mxu0 0.0
      %910 = vmatpush1.msra.mxu0 %v791
      %911 = vmatprep.subr.mxu0 0.0
      %912 = vmatpush1.msra.mxu0 0.0
      %913 = vmatprep.subr.mxu0 0.0
      %914 = vmatpush1.msra.mxu0 0.0
      %915 = vmatprep.subr.mxu0 0.0
      %916 = vmatpush1.msra.mxu0 0.0
      %917 = vmatprep.subr.mxu0 0.0
      %918 = vmatpush1.msra.mxu0 0.0
      %919 = vmatprep.subr.mxu0 0.0
      %920 = vmatpush1.msra.mxu0 0.0
      %921 = vmatprep.subr.mxu0 0.0
      %922 = vmatpush1.msra.mxu0 0.0
      %923 = vmatprep.subr.mxu0 0.0
      %924 = vmatpush1.msra.mxu0 0.0
      %925 = vmatprep.subr.mxu0 0.0
      %926 = vmatpush1.msra.mxu0 0.0
      %927 = vmatprep.subr.mxu0 0.0
      %928 = vmatpush1.msra.mxu0 0.0
      %929 = vmatprep.subr.mxu0 0.0
      %930 = vmatpush1.msra.mxu0 0.0
      %931 = vmatprep.subr.mxu0 0.0
      %932 = vmatpush1.msra.mxu0 0.0
      %933 = vmatprep.subr.mxu0 0.0
      %934 = vmatpush1.msra.mxu0 0.0
      %935 = vmatprep.subr.mxu0 0.0
      %936 = vmatpush1.msra.mxu0 0.0
      %937 = vmatprep.subr.mxu0 0.0
      %938 = vmatpush1.msra.mxu0 0.0
      %939 = vmatprep.subr.mxu0 0.0
      %940 = vmatpush1.msra.mxu0 0.0
      %941 = vmatprep.subr.mxu0 0.0
      %942 = vmatpush1.msra.mxu0 0.0
      %943 = vmatprep.subr.mxu0 0.0
      %944 = vmatpush1.msra.mxu0 0.0
      %945 = vmatprep.subr.mxu0 0.0
      %946 = vmatpush1.msra.mxu0 0.0
      %947 = vmatprep.subr.mxu0 0.0
      %948 = vmatpush1.msra.mxu0 0.0
      %949 = vmatprep.subr.mxu0 0.0
      %950 = vmatpush1.msra.mxu0 0.0
      %951 = vmatprep.subr.mxu0 0.0
      %952 = vmatpush1.msra.mxu0 0.0
      %953 = vmatprep.subr.mxu0 0.0
      %954 = vmatpush1.msra.mxu0 0.0
      %955 = vmatprep.subr.mxu0 0.0
      %956 = vmatpush1.msra.mxu0 0.0
      %957 = vmatprep.subr.mxu0 0.0
      %958 = vmatpush1.msra.mxu0 0.0
      %959 = vmatprep.subr.mxu0 0.0
      %960 = vmatpush1.msra.mxu0 0.0
      %961 = vmatprep.subr.mxu0 0.0
      %962 = vmatpush1.msra.mxu0 0.0
      %963 = vmatprep.subr.mxu0 0.0
      %964 = vmatpush1.msra.mxu0 0.0
      %965 = vmatprep.subr.mxu0 0.0
      %966 = vmatpush1.msra.mxu0 0.0
      %967 = vmatprep.subr.mxu0 0.0
      %968 = vmatpush1.msra.mxu0 0.0
      %969 = vmatprep.mubr.f32.mxu0 0.0
      %970 = vmatmul.mubr.f32.gmra.mrb[0].mxu0 %v903
      %v971 = vpop.f32.mrb[0].mxu0
      %v972 = vadd.f32 0.0, %v971
      %v973 = vpop.f32.mrb[0].mxu0
      %974 = vdwg.mxu0
      %v975 = vld [vmem:[%s696] sm:$0xff]
      %vm976 = vcmask 392192
      %v978 = vsel %vm976, %v975, 0
      %980 = vmatprep.subr.mxu0 0.0
      %981 = vmatpush1.msra.mxu0 %v894
      %982 = vmatprep.subr.mxu0 0.0
      %983 = vmatpush1.msra.mxu0 %v895
      %984 = vmatprep.subr.mxu0 0.0
      %985 = vmatpush1.msra.mxu0 %v896
      %986 = vmatprep.subr.mxu0 0.0
      %987 = vmatpush1.msra.mxu0 %v897
      %988 = vmatprep.subr.mxu0 0.0
      %989 = vmatpush1.msra.mxu0 %v898
      %990 = vmatprep.subr.mxu0 0.0
      %991 = vmatpush1.msra.mxu0 %v899
      %992 = vmatprep.subr.mxu0 0.0
      %993 = vmatpush1.msra.mxu0 0.0
      %994 = vmatprep.subr.mxu0 0.0
      %995 = vmatpush1.msra.mxu0 0.0
      %996 = vmatprep.subr.mxu0 0.0
      %997 = vmatpush1.msra.mxu0 0.0
      %998 = vmatprep.subr.mxu0 0.0
      %999 = vmatpush1.msra.mxu0 0.0
      %1000 = vmatprep.subr.mxu0 0.0
      %1001 = vmatpush1.msra.mxu0 0.0
      %1002 = vmatprep.subr.mxu0 0.0
      %1003 = vmatpush1.msra.mxu0 0.0
      %1004 = vmatprep.subr.mxu0 0.0
      %1005 = vmatpush1.msra.mxu0 0.0
      %1006 = vmatprep.subr.mxu0 0.0
      %1007 = vmatpush1.msra.mxu0 0.0
      %1008 = vmatprep.subr.mxu0 0.0
      %1009 = vmatpush1.msra.mxu0 0.0
      %1010 = vmatprep.subr.mxu0 0.0
      %1011 = vmatpush1.msra.mxu0 0.0
      %1012 = vmatprep.subr.mxu0 0.0
      %1013 = vmatpush1.msra.mxu0 0.0
      %1014 = vmatprep.subr.mxu0 0.0
      %1015 = vmatpush1.msra.mxu0 0.0
      %1016 = vmatprep.subr.mxu0 0.0
      %1017 = vmatpush1.msra.mxu0 0.0
      %1018 = vmatprep.subr.mxu0 0.0
      %1019 = vmatpush1.msra.mxu0 0.0
      %1020 = vmatprep.subr.mxu0 0.0
      %1021 = vmatpush1.msra.mxu0 0.0
      %1022 = vmatprep.subr.mxu0 0.0
      %1023 = vmatpush1.msra.mxu0 0.0
      %1024 = vmatprep.subr.mxu0 0.0
      %1025 = vmatpush1.msra.mxu0 0.0
      %1026 = vmatprep.subr.mxu0 0.0
      %1027 = vmatpush1.msra.mxu0 0.0
      %1028 = vmatprep.subr.mxu0 0.0
      %1029 = vmatpush1.msra.mxu0 0.0
      %1030 = vmatprep.subr.mxu0 0.0
      %1031 = vmatpush1.msra.mxu0 0.0
      %1032 = vmatprep.subr.mxu0 0.0
      %1033 = vmatpush1.msra.mxu0 0.0
      %1034 = vmatprep.subr.mxu0 0.0
      %1035 = vmatpush1.msra.mxu0 0.0
      %1036 = vmatprep.subr.mxu0 0.0
      %1037 = vmatpush1.msra.mxu0 0.0
      %1038 = vmatprep.subr.mxu0 0.0
      %1039 = vmatpush1.msra.mxu0 0.0
      %1040 = vmatprep.subr.mxu0 0.0
      %1041 = vmatpush1.msra.mxu0 0.0
      %1042 = vmatprep.subr.mxu0 0.0
      %1043 = vmatpush1.msra.mxu0 0.0
      %1044 = vmatprep.mubr.f32.mxu0 0.0
      %1045 = vmatmul.mubr.f32.gmra.mrb[0].mxu0 %v978
      %v1046 = vpop.f32.mrb[0].mxu0
      %v1047 = vadd.f32 0.0, %v1046
      %v1048 = vpop.f32.mrb[0].mxu0
      %1049 = vdwg.mxu0
      %v1050 = vpack.c.bf16 %v1047, %v1047
      %v1051 = vld [vmem:[%s9] sm:$0xf]
      %v1052 = vld [vmem:[%s9 + $0x4] sm:$0xf]
      %v1053 = vld [vmem:[%s9 + $0x8] sm:$0xf]
      %v1054 = vld [vmem:[%s9 + $0xc] sm:$0xf]
      %v1055 = vld [vmem:[%s15] sm:$0x1]
      %v1057 = vlaneseq
      %v1058 = vshrl.u32 %v1057, 7
      %v1059 = vsub.s32 0, %v1058
      %v1060 = vrot.slane %v1055, %v1059
      %v1066 = vunpack.c.l.b16 %v1051
      %v1067 = vunpack.c.l.b16 %v1052
      %v1068 = vunpack.c.l.b16 %v1053
      %v1069 = vunpack.c.l.b16 %v1054
      %v1070 = vpack.c.b16 %v1067, %v1066
      %v1071 = vpack.c.b16 %v1069, %v1068
      %vm1074 = vcmask 261120
      %v1076 = vsel %vm1074, %v1050, 0
      %1078 = vmatprep.subr.bf16.mxu0 0
      %1079 = vmatpush1.bf16.msra.mxu0 %v1070
      %1080 = vmatprep.subr.bf16.mxu0 0
      %1081 = vmatpush1.bf16.msra.mxu0 %v1071
      %1082 = vmatprep.subr.bf16.mxu0 0
      %1083 = vmatpush1.bf16.msra.mxu0 0
      %1084 = vmatprep.subr.bf16.mxu0 0
      %1085 = vmatpush1.bf16.msra.mxu0 0
      %1086 = vmatprep.subr.bf16.mxu0 0
      %1087 = vmatpush1.bf16.msra.mxu0 0
      %1088 = vmatprep.subr.bf16.mxu0 0
      %1089 = vmatpush1.bf16.msra.mxu0 0
      %1090 = vmatprep.subr.bf16.mxu0 0
      %1091 = vmatpush1.bf16.msra.mxu0 0
      %1092 = vmatprep.subr.bf16.mxu0 0
      %1093 = vmatpush1.bf16.msra.mxu0 0
      %1094 = vmatprep.subr.bf16.mxu0 0
      %1095 = vmatpush1.bf16.msra.mxu0 0
      %1096 = vmatprep.subr.bf16.mxu0 0
      %1097 = vmatpush1.bf16.msra.mxu0 0
      %1098 = vmatprep.subr.bf16.mxu0 0
      %1099 = vmatpush1.bf16.msra.mxu0 0
      %1100 = vmatprep.subr.bf16.mxu0 0
      %1101 = vmatpush1.bf16.msra.mxu0 0
      %1102 = vmatprep.subr.bf16.mxu0 0
      %1103 = vmatpush1.bf16.msra.mxu0 0
      %1104 = vmatprep.subr.bf16.mxu0 0
      %1105 = vmatpush1.bf16.msra.mxu0 0
      %1106 = vmatprep.subr.bf16.mxu0 0
      %1107 = vmatpush1.bf16.msra.mxu0 0
      %1108 = vmatprep.subr.bf16.mxu0 0
      %1109 = vmatpush1.bf16.msra.mxu0 0
      %1110 = vmatprep.mubr.bf16.mxu0 0
      %1111 = vmatmul.mubr.bf16.gmra.mrb[0].mxu0 %v1076
      %v1112 = vpop.f32.mrb[0].mxu0
      %v1113 = vadd.f32 %v1060, %v1112
      %v1114 = vpop.f32.mrb[0].mxu0
      %v1115 = vpop.f32.mrb[0].mxu0
      %v1116 = vpop.f32.mrb[0].mxu0
      %1117 = vdwg.mxu0
      %v1118 = vtanh.pop %v1113
      %v1119 = vld [vmem:[%s6] sm:$0xff]
      %v1120 = vld [vmem:[%s6 + $0x8] sm:$0x3f]
      %v1121 = vpack.c.bf16 %v972, %v972
      %v1122 = vld [vmem:[%s11] sm:$0xf]
      %v1123 = vld [vmem:[%s11 + $0x4] sm:$0xf]
      %v1124 = vld [vmem:[%s11 + $0x8] sm:$0xf]
      %v1125 = vld [vmem:[%s11 + $0xc] sm:$0xf]
      %v1130 = vunpack.c.l.b16 %v1122
      %v1131 = vunpack.c.l.b16 %v1123
      %v1132 = vunpack.c.l.b16 %v1124
      %v1133 = vunpack.c.l.b16 %v1125
      %v1134 = vpack.c.b16 %v1131, %v1130
      %v1135 = vpack.c.b16 %v1133, %v1132
      %v1139 = vsel %vm1074, %v1121, 0
      %1141 = vmatprep.subr.bf16.mxu0 0
      %1142 = vmatpush1.bf16.msra.mxu0 %v1134
      %1143 = vmatprep.subr.bf16.mxu0 0
      %1144 = vmatpush1.bf16.msra.mxu0 %v1135
      %1145 = vmatprep.subr.bf16.mxu0 0
      %1146 = vmatpush1.bf16.msra.mxu0 0
      %1147 = vmatprep.subr.bf16.mxu0 0
      %1148 = vmatpush1.bf16.msra.mxu0 0
      %1149 = vmatprep.subr.bf16.mxu0 0
      %1150 = vmatpush1.bf16.msra.mxu0 0
      %1151 = vmatprep.subr.bf16.mxu0 0
      %1152 = vmatpush1.bf16.msra.mxu0 0
      %1153 = vmatprep.subr.bf16.mxu0 0
      %1154 = vmatpush1.bf16.msra.mxu0 0
      %1155 = vmatprep.subr.bf16.mxu0 0
      %1156 = vmatpush1.bf16.msra.mxu0 0
      %1157 = vmatprep.subr.bf16.mxu0 0
      %1158 = vmatpush1.bf16.msra.mxu0 0
      %1159 = vmatprep.subr.bf16.mxu0 0
      %1160 = vmatpush1.bf16.msra.mxu0 0
      %1161 = vmatprep.subr.bf16.mxu0 0
      %1162 = vmatpush1.bf16.msra.mxu0 0
      %1163 = vmatprep.subr.bf16.mxu0 0
      %1164 = vmatpush1.bf16.msra.mxu0 0
      %1165 = vmatprep.subr.bf16.mxu0 0
      %1166 = vmatpush1.bf16.msra.mxu0 0
      %1167 = vmatprep.subr.bf16.mxu0 0
      %1168 = vmatpush1.bf16.msra.mxu0 0
      %1169 = vmatprep.subr.bf16.mxu0 0
      %1170 = vmatpush1.bf16.msra.mxu0 0
      %1171 = vmatprep.subr.bf16.mxu0 0
      %1172 = vmatpush1.bf16.msra.mxu0 0
      %1173 = vmatprep.mubr.bf16.mxu0 0
      %1174 = vmatmul.mubr.bf16.gmra.mrb[0].mxu0 %v1139
      %v1175 = vpop.f32.mrb[0].mxu0
      %v1176 = vadd.f32 0.0, %v1175
      %v1177 = vpop.f32.mrb[0].mxu0
      %v1178 = vpop.f32.mrb[0].mxu0
      %v1179 = vpop.f32.mrb[0].mxu0
      %1180 = vdwg.mxu0
      %vm1181 = vcmask 15360
      %v1183 = vsel %vm1181, %v1119, 0
      %v1186 = vsel %vm1181, %v1120, 0
      %vm1188 = vcmask 1041408
      %v1190 = vsel %vm1188, %v1176, 0
      %1192 = vmatprep.subr.mxu0 0.0
      %1193 = vmatpush1.msra.mxu0 %v1190
      %1194 = vmatprep.subr.mxu0 0.0
      %1195 = vmatpush1.msra.mxu0 0.0
      %1196 = vmatprep.subr.mxu0 0.0
      %1197 = vmatpush1.msra.mxu0 0.0
      %1198 = vmatprep.subr.mxu0 0.0
      %1199 = vmatpush1.msra.mxu0 0.0
      %1200 = vmatprep.subr.mxu0 0.0
      %1201 = vmatpush1.msra.mxu0 0.0
      %1202 = vmatprep.subr.mxu0 0.0
      %1203 = vmatpush1.msra.mxu0 0.0
      %1204 = vmatprep.subr.mxu0 0.0
      %1205 = vmatpush1.msra.mxu0 0.0
      %1206 = vmatprep.subr.mxu0 0.0
      %1207 = vmatpush1.msra.mxu0 0.0
      %1208 = vmatprep.subr.mxu0 0.0
      %1209 = vmatpush1.msra.mxu0 0.0
      %1210 = vmatprep.subr.mxu0 0.0
      %1211 = vmatpush1.msra.mxu0 0.0
      %1212 = vmatprep.subr.mxu0 0.0
      %1213 = vmatpush1.msra.mxu0 0.0
      %1214 = vmatprep.subr.mxu0 0.0
      %1215 = vmatpush1.msra.mxu0 0.0
      %1216 = vmatprep.subr.mxu0 0.0
      %1217 = vmatpush1.msra.mxu0 0.0
      %1218 = vmatprep.subr.mxu0 0.0
      %1219 = vmatpush1.msra.mxu0 0.0
      %1220 = vmatprep.subr.mxu0 0.0
      %1221 = vmatpush1.msra.mxu0 0.0
      %1222 = vmatprep.subr.mxu0 0.0
      %1223 = vmatpush1.msra.mxu0 0.0
      %1224 = vmatprep.subr.mxu0 0.0
      %1225 = vmatpush1.msra.mxu0 0.0
      %1226 = vmatprep.subr.mxu0 0.0
      %1227 = vmatpush1.msra.mxu0 0.0
      %1228 = vmatprep.subr.mxu0 0.0
      %1229 = vmatpush1.msra.mxu0 0.0
      %1230 = vmatprep.subr.mxu0 0.0
      %1231 = vmatpush1.msra.mxu0 0.0
      %1232 = vmatprep.subr.mxu0 0.0
      %1233 = vmatpush1.msra.mxu0 0.0
      %1234 = vmatprep.subr.mxu0 0.0
      %1235 = vmatpush1.msra.mxu0 0.0
      %1236 = vmatprep.subr.mxu0 0.0
      %1237 = vmatpush1.msra.mxu0 0.0
      %1238 = vmatprep.subr.mxu0 0.0
      %1239 = vmatpush1.msra.mxu0 0.0
      %1240 = vmatprep.subr.mxu0 0.0
      %1241 = vmatpush1.msra.mxu0 0.0
      %1242 = vmatprep.subr.mxu0 0.0
      %1243 = vmatpush1.msra.mxu0 0.0
      %1244 = vmatprep.subr.mxu0 0.0
      %1245 = vmatpush1.msra.mxu0 0.0
      %1246 = vmatprep.subr.mxu0 0.0
      %1247 = vmatpush1.msra.mxu0 0.0
      %1248 = vmatprep.subr.mxu0 0.0
      %1249 = vmatpush1.msra.mxu0 0.0
      %1250 = vmatprep.subr.mxu0 0.0
      %1251 = vmatpush1.msra.mxu0 0.0
      %1252 = vmatprep.subr.mxu0 0.0
      %1253 = vmatpush1.msra.mxu0 0.0
      %1254 = vmatprep.subr.mxu0 0.0
      %1255 = vmatpush1.msra.mxu0 0.0
      %1256 = vmatprep.mubr.f32.mxu0 0.0
      %1257 = vmatmul.mubr.f32.gmra.mrb[0].mxu0 %v1183
      %v1258 = vpop.f32.mrb[0].mxu0
      %v1259 = vadd.f32 0.0, %v1258
      %v1260 = vpop.f32.mrb[0].mxu0
      %1261 = vmatprep.mubr.f32.mxu0 0.0
      %1262 = vmatmul.mubr.f32.gmra.mrb[0].mxu0 %v1186
      %v1263 = vpop.f32.mrb[0].mxu0
      %v1264 = vadd.f32 0.0, %v1263
      %v1265 = vpop.f32.mrb[0].mxu0
      %1266 = vdwg.mxu0
      %v1267 = vld [vmem:[%s684] sm:$0xf]
      %v1268 = vld [vmem:[%s684 + $0x4] sm:$0x7]
      %v1269 = vld [vmem:[%s10] sm:$0xf]
      %v1270 = vld [vmem:[%s10 + $0x4] sm:$0xf]
      %v1273 = vunpack.c.l.b16 %v1267
      %v1274 = vunpack.c.l.b16 %v1268
      %v1275 = vpack.c.b16 %v1274, %v1273
      %v1278 = vunpack.c.l.b16 %v1269
      %v1279 = vunpack.c.l.b16 %v1270
      %v1280 = vpack.c.b16 %v1279, %v1278
      %v1283 = vsel %vm734, %v1275, 0
      %1285 = vmatprep.subr.bf16.mxu0 0
      %1286 = vmatpush1.bf16.msra.mxu0 %v1280
      %1287 = vmatprep.subr.bf16.mxu0 0
      %1288 = vmatpush1.bf16.msra.mxu0 0
      %1289 = vmatprep.subr.bf16.mxu0 0
      %1290 = vmatpush1.bf16.msra.mxu0 0
      %1291 = vmatprep.subr.bf16.mxu0 0
      %1292 = vmatpush1.bf16.msra.mxu0 0
      %1293 = vmatprep.subr.bf16.mxu0 0
      %1294 = vmatpush1.bf16.msra.mxu0 0
      %1295 = vmatprep.subr.bf16.mxu0 0
      %1296 = vmatpush1.bf16.msra.mxu0 0
      %1297 = vmatprep.subr.bf16.mxu0 0
      %1298 = vmatpush1.bf16.msra.mxu0 0
      %1299 = vmatprep.subr.bf16.mxu0 0
      %1300 = vmatpush1.bf16.msra.mxu0 0
      %1301 = vmatprep.subr.bf16.mxu0 0
      %1302 = vmatpush1.bf16.msra.mxu0 0
      %1303 = vmatprep.subr.bf16.mxu0 0
      %1304 = vmatpush1.bf16.msra.mxu0 0
      %1305 = vmatprep.subr.bf16.mxu0 0
      %1306 = vmatpush1.bf16.msra.mxu0 0
      %1307 = vmatprep.subr.bf16.mxu0 0
      %1308 = vmatpush1.bf16.msra.mxu0 0
      %1309 = vmatprep.subr.bf16.mxu0 0
      %1310 = vmatpush1.bf16.msra.mxu0 0
      %1311 = vmatprep.subr.bf16.mxu0 0
      %1312 = vmatpush1.bf16.msra.mxu0 0
      %1313 = vmatprep.subr.bf16.mxu0 0
      %1314 = vmatpush1.bf16.msra.mxu0 0
      %1315 = vmatprep.subr.bf16.mxu0 0
      %1316 = vmatpush1.bf16.msra.mxu0 0
      %1317 = vmatprep.mubr.bf16.mxu0 0
      %1318 = vmatmul.mubr.bf16.gmra.mrb[0].mxu0 %v1283
      %v1319 = vpop.f32.mrb[0].mxu0
      %v1320 = vadd.f32 %v1259, %v1319
      %v1321 = vpop.f32.mrb[0].mxu0
      %v1322 = vpop.f32.mrb[0].mxu0
      %v1323 = vadd.f32 %v1264, %v1322
      %v1324 = vpop.f32.mrb[0].mxu0
      %1325 = vdwg.mxu0
      %v1326 = vld [vmem:[%s16] sm:$0x1]
      %v1328 = vlaneseq
      %v1329 = vshrl.u32 %v1328, 7
      %v1330 = vsub.s32 0, %v1329
      %v1331 = vrot.slane %v1326, %v1330
      %v1333 = vadd.f32 %v1320, %v1331
      %v1334 = vadd.f32 %v1323, %v1331
      %v1335 = vtanh.pop %v1333
      %v1336 = vtanh.pop %v1334
      %v1337 = vmul.f32 %v1335, 0.17677669
      %v1338 = vmul.f32 %v1336, 0.17677669
      %v1339 = vpack.c.bf16 %v1338, %v1337
      %v1340 = vpack.c.bf16 %v790, %v789
      %v1341 = vpack.c.bf16 %v791, %v791
      %v1342 = vpack.c.bf16 %v1118, %v1118
      %v1343 = vpack.c.bf16 %v895, %v894
      %v1344 = vpack.c.bf16 %v897, %v896
      %v1345 = vpack.c.bf16 %v899, %v898
      %v1346 = vld [vmem:[%s688] sm:$0x3]
      %v1348 = vsel %vm1188, %v1346, 0
      %1350 = vmatprep.subr.mxu0 0.0
      %1351 = vmatpush1.msra.mxu0 %v1348
      %1352 = vmatprep.subr.mxu0 0.0
      %1353 = vmatpush1.msra.mxu0 0.0
      %1354 = vmatprep.subr.mxu0 0.0
      %1355 = vmatpush1.msra.mxu0 0.0
      %1356 = vmatprep.subr.mxu0 0.0
      %1357 = vmatpush1.msra.mxu0 0.0
      %1358 = vmatprep.subr.mxu0 0.0
      %1359 = vmatpush1.msra.mxu0 0.0
      %1360 = vmatprep.subr.mxu0 0.0
      %1361 = vmatpush1.msra.mxu0 0.0
      %1362 = vmatprep.subr.mxu0 0.0
      %1363 = vmatpush1.msra.mxu0 0.0
      %1364 = vmatprep.subr.mxu0 0.0
      %1365 = vmatpush1.msra.mxu0 0.0
      %1366 = vmatprep.subr.mxu0 0.0
      %1367 = vmatpush1.msra.mxu0 0.0
      %1368 = vmatprep.subr.mxu0 0.0
      %1369 = vmatpush1.msra.mxu0 0.0
      %1370 = vmatprep.subr.mxu0 0.0
      %1371 = vmatpush1.msra.mxu0 0.0
      %1372 = vmatprep.subr.mxu0 0.0
      %1373 = vmatpush1.msra.mxu0 0.0
      %1374 = vmatprep.subr.mxu0 0.0
      %1375 = vmatpush1.msra.mxu0 0.0
      %1376 = vmatprep.subr.mxu0 0.0
      %1377 = vmatpush1.msra.mxu0 0.0
      %1378 = vmatprep.subr.mxu0 0.0
      %1379 = vmatpush1.msra.mxu0 0.0
      %1380 = vmatprep.subr.mxu0 0.0
      %1381 = vmatpush1.msra.mxu0 0.0
      %1382 = vmatprep.subr.mxu0 0.0
      %1383 = vmatpush1.msra.mxu0 0.0
      %1384 = vmatprep.subr.mxu0 0.0
      %1385 = vmatpush1.msra.mxu0 0.0
      %1386 = vmatprep.subr.mxu0 0.0
      %1387 = vmatpush1.msra.mxu0 0.0
      %1388 = vmatprep.subr.mxu0 0.0
      %1389 = vmatpush1.msra.mxu0 0.0
      %1390 = vmatprep.subr.mxu0 0.0
      %1391 = vmatpush1.msra.mxu0 0.0
      %1392 = vmatprep.subr.mxu0 0.0
      %1393 = vmatpush1.msra.mxu0 0.0
      %1394 = vmatprep.subr.mxu0 0.0
      %1395 = vmatpush1.msra.mxu0 0.0
      %1396 = vmatprep.subr.mxu0 0.0
      %1397 = vmatpush1.msra.mxu0 0.0
      %1398 = vmatprep.subr.mxu0 0.0
      %1399 = vmatpush1.msra.mxu0 0.0
      %1400 = vmatprep.subr.mxu0 0.0
      %1401 = vmatpush1.msra.mxu0 0.0
      %1402 = vmatprep.subr.mxu0 0.0
      %1403 = vmatpush1.msra.mxu0 0.0
      %1404 = vmatprep.subr.mxu0 0.0
      %1405 = vmatpush1.msra.mxu0 0.0
      %1406 = vmatprep.subr.mxu0 0.0
      %1407 = vmatpush1.msra.mxu0 0.0
      %1408 = vmatprep.subr.mxu0 0.0
      %1409 = vmatpush1.msra.mxu0 0.0
      %1410 = vmatprep.subr.mxu0 0.0
      %1411 = vmatpush1.msra.mxu0 0.0
      %1412 = vmatprep.subr.mxu0 0.0
      %1413 = vmatpush1.msra.mxu0 0.0
      %1414 = vmatprep.mubr.f32.mxu0 0.0
      %1415 = vmatmul.mubr.f32.gmra.mrb[0].mxu0 %v1183
      %v1416 = vpop.f32.mrb[0].mxu0
      %v1417 = vadd.f32 0.0, %v1416
      %v1418 = vpop.f32.mrb[0].mxu0
      %1419 = vmatprep.mubr.f32.mxu0 0.0
      %1420 = vmatmul.mubr.f32.gmra.mrb[0].mxu0 %v1186
      %v1421 = vpop.f32.mrb[0].mxu0
      %v1422 = vadd.f32 0.0, %v1421
      %v1423 = vpop.f32.mrb[0].mxu0
      %1424 = vdwg.mxu0
      %v1426 = vsel %vm1074, %v1339, 0
      %v1429 = vsel %vm1074, %v1340, 0
      %v1432 = vsel %vm1074, %v1341, 0
      %1434 = vmatprep.subr.bf16.mxu0 0
      %1435 = vmatpush1.bf16.xpose.msra.mxu0 %v1429
      %1436 = vmatprep.subr.bf16.mxu0 0
      %1437 = vmatpush1.bf16.xpose.msra.mxu0 %v1432
      %1438 = vmatprep.subr.bf16.mxu0 0
      %1439 = vmatpush1.bf16.xpose.msra.mxu0 0
      %1440 = vmatprep.subr.bf16.mxu0 0
      %1441 = vmatpush1.bf16.xpose.msra.mxu0 0
      %1442 = vmatprep.subr.bf16.mxu0 0
      %1443 = vmatpush1.bf16.xpose.msra.mxu0 0
      %1444 = vmatprep.subr.bf16.mxu0 0
      %1445 = vmatpush1.bf16.xpose.msra.mxu0 0
      %1446 = vmatprep.subr.bf16.mxu0 0
      %1447 = vmatpush1.bf16.xpose.msra.mxu0 0
      %1448 = vmatprep.subr.bf16.mxu0 0
      %1449 = vmatpush1.bf16.xpose.msra.mxu0 0
      %1450 = vmatprep.subr.bf16.mxu0 0
      %1451 = vmatpush1.bf16.xpose.msra.mxu0 0
      %1452 = vmatprep.subr.bf16.mxu0 0
      %1453 = vmatpush1.bf16.xpose.msra.mxu0 0
      %1454 = vmatprep.subr.bf16.mxu0 0
      %1455 = vmatpush1.bf16.xpose.msra.mxu0 0
      %1456 = vmatprep.subr.bf16.mxu0 0
      %1457 = vmatpush1.bf16.xpose.msra.mxu0 0
      %1458 = vmatprep.subr.bf16.mxu0 0
      %1459 = vmatpush1.bf16.xpose.msra.mxu0 0
      %1460 = vmatprep.subr.bf16.mxu0 0
      %1461 = vmatpush1.bf16.xpose.msra.mxu0 0
      %1462 = vmatprep.subr.bf16.mxu0 0
      %1463 = vmatpush1.bf16.xpose.msra.mxu0 0
      %1464 = vmatprep.subr.bf16.mxu0 0
      %1465 = vmatpush1.bf16.xpose.msra.mxu0 0
      %1466 = vmatprep.mubr.bf16.mxu0 0
      %1467 = vmatmul.mubr.bf16.gmra.mrb[0].mxu0 %v1426
      %v1468 = vpop.f32.mrb[0].mxu0
      %v1469 = vadd.f32 0.0, %v1468
      %v1470 = vpop.f32.mrb[0].mxu0
      %v1471 = vpop.f32.mrb[0].mxu0
      %v1472 = vadd.f32 0.0, %v1471
      %v1473 = vpop.f32.mrb[0].mxu0
      %1474 = vdwg.mxu0
      %v1476 = vsel %vm1074, %v1342, 0
      %1478 = vmatprep.subr.bf16.mxu0 0
      %1479 = vmatpush1.bf16.xpose.msra.mxu0 %v1476
      %1480 = vmatprep.subr.bf16.mxu0 0
      %1481 = vmatpush1.bf16.xpose.msra.mxu0 0
      %1482 = vmatprep.subr.bf16.mxu0 0
      %1483 = vmatpush1.bf16.xpose.msra.mxu0 0
      %1484 = vmatprep.subr.bf16.mxu0 0
      %1485 = vmatpush1.bf16.xpose.msra.mxu0 0
      %1486 = vmatprep.subr.bf16.mxu0 0
      %1487 = vmatpush1.bf16.xpose.msra.mxu0 0
      %1488 = vmatprep.subr.bf16.mxu0 0
      %1489 = vmatpush1.bf16.xpose.msra.mxu0 0
      %1490 = vmatprep.subr.bf16.mxu0 0
      %1491 = vmatpush1.bf16.xpose.msra.mxu0 0
      %1492 = vmatprep.subr.bf16.mxu0 0
      %1493 = vmatpush1.bf16.xpose.msra.mxu0 0
      %1494 = vmatprep.subr.bf16.mxu0 0
      %1495 = vmatpush1.bf16.xpose.msra.mxu0 0
      %1496 = vmatprep.subr.bf16.mxu0 0
      %1497 = vmatpush1.bf16.xpose.msra.mxu0 0
      %1498 = vmatprep.subr.bf16.mxu0 0
      %1499 = vmatpush1.bf16.xpose.msra.mxu0 0
      %1500 = vmatprep.subr.bf16.mxu0 0
      %1501 = vmatpush1.bf16.xpose.msra.mxu0 0
      %1502 = vmatprep.subr.bf16.mxu0 0
      %1503 = vmatpush1.bf16.xpose.msra.mxu0 0
      %1504 = vmatprep.subr.bf16.mxu0 0
      %1505 = vmatpush1.bf16.xpose.msra.mxu0 0
      %1506 = vmatprep.subr.bf16.mxu0 0
      %1507 = vmatpush1.bf16.xpose.msra.mxu0 0
      %1508 = vmatprep.subr.bf16.mxu0 0
      %1509 = vmatpush1.bf16.xpose.msra.mxu0 0
      %1510 = vmatprep.mubr.bf16.mxu0 0
      %1511 = vmatmul.mubr.bf16.gmra.mrb[0].mxu0 %v1426
      %v1512 = vpop.f32.mrb[0].mxu0
      %v1513 = vadd.f32 0.0, %v1512
      %v1514 = vpop.f32.mrb[0].mxu0
      %v1515 = vpop.f32.mrb[0].mxu0
      %v1516 = vadd.f32 0.0, %v1515
      %v1517 = vpop.f32.mrb[0].mxu0
      %1518 = vdwg.mxu0
      %v1520 = vsel %vm1074, %v1343, 0
      %v1523 = vsel %vm1074, %v1344, 0
      %v1526 = vsel %vm1074, %v1345, 0
      %1528 = vmatprep.subr.bf16.mxu0 0
      %1529 = vmatpush1.bf16.xpose.msra.mxu0 %v1520
      %1530 = vmatprep.subr.bf16.mxu0 0
      %1531 = vmatpush1.bf16.xpose.msra.mxu0 %v1523
      %1532 = vmatprep.subr.bf16.mxu0 0
      %1533 = vmatpush1.bf16.xpose.msra.mxu0 %v1526
      %1534 = vmatprep.subr.bf16.mxu0 0
      %1535 = vmatpush1.bf16.xpose.msra.mxu0 0
      %1536 = vmatprep.subr.bf16.mxu0 0
      %1537 = vmatpush1.bf16.xpose.msra.mxu0 0
      %1538 = vmatprep.subr.bf16.mxu0 0
      %1539 = vmatpush1.bf16.xpose.msra.mxu0 0
      %1540 = vmatprep.subr.bf16.mxu0 0
      %1541 = vmatpush1.bf16.xpose.msra.mxu0 0
      %1542 = vmatprep.subr.bf16.mxu0 0
      %1543 = vmatpush1.bf16.xpose.msra.mxu0 0
      %1544 = vmatprep.subr.bf16.mxu0 0
      %1545 = vmatpush1.bf16.xpose.msra.mxu0 0
      %1546 = vmatprep.subr.bf16.mxu0 0
      %1547 = vmatpush1.bf16.xpose.msra.mxu0 0
      %1548 = vmatprep.subr.bf16.mxu0 0
      %1549 = vmatpush1.bf16.xpose.msra.mxu0 0
      %1550 = vmatprep.subr.bf16.mxu0 0
      %1551 = vmatpush1.bf16.xpose.msra.mxu0 0
      %1552 = vmatprep.subr.bf16.mxu0 0
      %1553 = vmatpush1.bf16.xpose.msra.mxu0 0
      %1554 = vmatprep.subr.bf16.mxu0 0
      %1555 = vmatpush1.bf16.xpose.msra.mxu0 0
      %1556 = vmatprep.subr.bf16.mxu0 0
      %1557 = vmatpush1.bf16.xpose.msra.mxu0 0
      %1558 = vmatprep.subr.bf16.mxu0 0
      %1559 = vmatpush1.bf16.xpose.msra.mxu0 0
      %1560 = vmatprep.mubr.bf16.mxu0 0
      %1561 = vmatmul.mubr.bf16.gmra.mrb[0].mxu0 %v1426
      %v1562 = vpop.f32.mrb[0].mxu0
      %v1563 = vadd.f32 0.0, %v1562
      %v1564 = vpop.f32.mrb[0].mxu0
      %v1565 = vpop.f32.mrb[0].mxu0
      %v1566 = vadd.f32 0.0, %v1565
      %v1567 = vpop.f32.mrb[0].mxu0
      %1568 = vdwg.mxu0
      %vm1569 = vcmp.gt.f32.partialorder %v1417, 0.0
      %vm1570 = vcmp.gt.f32.partialorder %v1422, 0.0
      %v1571 = vsel %vm1569, %v1469, -1e+30
      %v1572 = vsel %vm1570, %v1472, -1e+30
      %v1573 = vsel %vm901, %v1571, -inf
      %1574 = vmax.xlane.f32.xlu0 %v1573
      %v1575 = vpop.xlane.xlu0 %1574
      %vm1576 = vcmask 193536
      %v1577 = vsel %vm1576, %v1572, -inf
      %1578 = vmax.xlane.f32.xlu0 %v1577
      %v1579 = vpop.xlane.xlu0 %1578
      %v1580 = vsub.f32 %v1571, %v1575
      %v1581 = vsub.f32 %v1572, %v1579
      %v1582 = vmul.f32 %v1580, 1.442695
      %v1583 = vpow.pop %v1582
      %v1584 = vmul.f32 %v1581, 1.442695
      %v1585 = vpow.pop %v1584
      %v1586 = vsel %vm1569, %v1583, 0.0
      %v1587 = vsel %vm1570, %v1585, 0.0
      %v1588 = vsel %vm901, %v1586, 0.0
      %1589 = vadd.xlane.f32.xlu0 %v1588
      %v1590 = vpop.xlane.xlu0 %1589
      %v1591 = vsel %vm1576, %v1587, 0.0
      %1592 = vadd.xlane.f32.xlu0 %v1591
      %v1593 = vpop.xlane.xlu0 %1592
      %v1594 = vmax.f32 %v1590, 1e-30
      %v1595 = vmax.f32 %v1593, 1e-30
      %v1596 = vrcp.pop %v1594
      %v1597 = vrcp.pop %v1595
      %v1598 = vmul.f32 %v1586, %v1596
      %v1599 = vmul.f32 %v1587, %v1597
      %1602 = vrot.lane.b32.xlu0 %v1513, 24
      %v1603 = vpop.permute.xlu0 %1602
      %1604 = vrot.lane.b32.xlu0 %v1516, 24
      %v1605 = vpop.permute.xlu0 %1604
      %v1608 = vsel %vm1569, %v1603, -1e+30
      %v1609 = vsel %vm1570, %v1605, -1e+30
      %vm1610 = vcmask 261312
      %v1611 = vsel %vm1610, %v1608, -inf
      %1612 = vmax.xlane.f32.xlu0 %v1611
      %v1613 = vpop.xlane.xlu0 %1612
      %vm1614 = vcmask 259264
      %v1615 = vsel %vm1614, %v1609, -inf
      %1616 = vmax.xlane.f32.xlu0 %v1615
      %v1617 = vpop.xlane.xlu0 %1616
      %v1618 = vsub.f32 %v1608, %v1613
      %v1619 = vsub.f32 %v1609, %v1617
      %v1620 = vmul.f32 %v1618, 1.442695
      %v1621 = vpow.pop %v1620
      %v1622 = vmul.f32 %v1619, 1.442695
      %v1623 = vpow.pop %v1622
      %v1624 = vsel %vm1569, %v1621, 0.0
      %v1625 = vsel %vm1570, %v1623, 0.0
      %1628 = vrot.lane.b32.xlu0 %v1624, 104
      %v1629 = vpop.permute.xlu0 %1628
      %1630 = vrot.lane.b32.xlu0 %v1625, 104
      %v1631 = vpop.permute.xlu0 %1630
      %vm1634 = vcmask 64512
      %v1635 = vsel %vm1634, %v1629, 0.0
      %1636 = vadd.xlane.f32.xlu0 %v1635
      %v1637 = vpop.xlane.xlu0 %1636
      %vm1638 = vcmask 62464
      %v1639 = vsel %vm1638, %v1631, 0.0
      %1640 = vadd.xlane.f32.xlu0 %v1639
      %v1641 = vpop.xlane.xlu0 %1640
      %v1642 = vmax.f32 %v1637, 1e-30
      %v1643 = vmax.f32 %v1641, 1e-30
      %v1644 = vrcp.pop %v1642
      %v1645 = vrcp.pop %v1643
      %v1646 = vmul.f32 %v1624, %v1644
      %v1647 = vmul.f32 %v1625, %v1645
      %1650 = vrot.lane.b32.xlu0 %v1563, 32
      %v1651 = vpop.permute.xlu0 %1650
      %1652 = vrot.lane.b32.xlu0 %v1566, 32
      %v1653 = vpop.permute.xlu0 %1652
      %v1656 = vsel %vm1569, %v1651, -1e+30
      %v1657 = vsel %vm1570, %v1653, -1e+30
      %vm1658 = vcmask 654592
      %v1659 = vsel %vm1658, %v1656, -inf
      %1660 = vmax.xlane.f32.xlu0 %v1659
      %v1661 = vpop.xlane.xlu0 %1660
      %vm1662 = vcmask 652544
      %v1663 = vsel %vm1662, %v1657, -inf
      %1664 = vmax.xlane.f32.xlu0 %v1663
      %v1665 = vpop.xlane.xlu0 %1664
      %v1666 = vsub.f32 %v1656, %v1661
      %v1667 = vsub.f32 %v1657, %v1665
      %v1668 = vmul.f32 %v1666, 1.442695
      %v1669 = vpow.pop %v1668
      %v1670 = vmul.f32 %v1667, 1.442695
      %v1671 = vpow.pop %v1670
      %v1672 = vsel %vm1569, %v1669, 0.0
      %v1673 = vsel %vm1570, %v1671, 0.0
      %1676 = vrot.lane.b32.xlu0 %v1672, 96
      %v1677 = vpop.permute.xlu0 %1676
      %1678 = vrot.lane.b32.xlu0 %v1673, 96
      %v1679 = vpop.permute.xlu0 %1678
      %v1682 = vsel %vm976, %v1677, 0.0
      %1683 = vadd.xlane.f32.xlu0 %v1682
      %v1684 = vpop.xlane.xlu0 %1683
      %vm1685 = vcmask 390144
      %v1686 = vsel %vm1685, %v1679, 0.0
      %1687 = vadd.xlane.f32.xlu0 %v1686
      %v1688 = vpop.xlane.xlu0 %1687
      %v1689 = vmax.f32 %v1684, 1e-30
      %v1690 = vmax.f32 %v1688, 1e-30
      %v1691 = vrcp.pop %v1689
      %v1692 = vrcp.pop %v1690
      %v1693 = vmul.f32 %v1672, %v1691
      %v1694 = vmul.f32 %v1673, %v1692
      %v1695 = vpack.c.bf16 %v1599, %v1598
      %v1697 = vsel %vm901, %v1695, 0
      %vm1699 = vcmask 1043456
      %v1700 = vsel %vm1699, %v1341, 0
      %1702 = vmatprep.subr.bf16.mxu0 0
      %1703 = vmatpush1.bf16.msra.mxu0 %v1340
      %1704 = vmatprep.subr.bf16.mxu0 0
      %1705 = vmatpush1.bf16.msra.mxu0 %v1700
      %1706 = vmatprep.subr.bf16.mxu0 0
      %1707 = vmatpush1.bf16.msra.mxu0 0
      %1708 = vmatprep.subr.bf16.mxu0 0
      %1709 = vmatpush1.bf16.msra.mxu0 0
      %1710 = vmatprep.subr.bf16.mxu0 0
      %1711 = vmatpush1.bf16.msra.mxu0 0
      %1712 = vmatprep.subr.bf16.mxu0 0
      %1713 = vmatpush1.bf16.msra.mxu0 0
      %1714 = vmatprep.subr.bf16.mxu0 0
      %1715 = vmatpush1.bf16.msra.mxu0 0
      %1716 = vmatprep.subr.bf16.mxu0 0
      %1717 = vmatpush1.bf16.msra.mxu0 0
      %1718 = vmatprep.subr.bf16.mxu0 0
      %1719 = vmatpush1.bf16.msra.mxu0 0
      %1720 = vmatprep.subr.bf16.mxu0 0
      %1721 = vmatpush1.bf16.msra.mxu0 0
      %1722 = vmatprep.subr.bf16.mxu0 0
      %1723 = vmatpush1.bf16.msra.mxu0 0
      %1724 = vmatprep.subr.bf16.mxu0 0
      %1725 = vmatpush1.bf16.msra.mxu0 0
      %1726 = vmatprep.subr.bf16.mxu0 0
      %1727 = vmatpush1.bf16.msra.mxu0 0
      %1728 = vmatprep.subr.bf16.mxu0 0
      %1729 = vmatpush1.bf16.msra.mxu0 0
      %1730 = vmatprep.subr.bf16.mxu0 0
      %1731 = vmatpush1.bf16.msra.mxu0 0
      %1732 = vmatprep.subr.bf16.mxu0 0
      %1733 = vmatpush1.bf16.msra.mxu0 0
      %1734 = vmatprep.mubr.bf16.mxu0 0
      %1735 = vmatmul.mubr.bf16.gmra.mrb[0].mxu0 %v1697
      %v1736 = vpop.f32.mrb[0].mxu0
      %v1737 = vadd.f32 0.0, %v1736
      %v1738 = vpop.f32.mrb[0].mxu0
      %v1739 = vpop.f32.mrb[0].mxu0
      %v1740 = vadd.f32 0.0, %v1739
      %v1741 = vpop.f32.mrb[0].mxu0
      %1742 = vdwg.mxu0
      %v1743 = vpack.c.bf16 %v1647, %v1646
      %1745 = vrot.lane.b32.xlu0 %v1743, 104
      %v1746 = vpop.permute.xlu0 %1745
      %v1748 = vsel %vm1634, %v1746, 0
      %v1750 = vsel %vm1699, %v1342, 0
      %1752 = vmatprep.subr.bf16.mxu0 0
      %1753 = vmatpush1.bf16.msra.mxu0 %v1750
      %1754 = vmatprep.subr.bf16.mxu0 0
      %1755 = vmatpush1.bf16.msra.mxu0 0
      %1756 = vmatprep.subr.bf16.mxu0 0
      %1757 = vmatpush1.bf16.msra.mxu0 0
      %1758 = vmatprep.subr.bf16.mxu0 0
      %1759 = vmatpush1.bf16.msra.mxu0 0
      %1760 = vmatprep.subr.bf16.mxu0 0
      %1761 = vmatpush1.bf16.msra.mxu0 0
      %1762 = vmatprep.subr.bf16.mxu0 0
      %1763 = vmatpush1.bf16.msra.mxu0 0
      %1764 = vmatprep.subr.bf16.mxu0 0
      %1765 = vmatpush1.bf16.msra.mxu0 0
      %1766 = vmatprep.subr.bf16.mxu0 0
      %1767 = vmatpush1.bf16.msra.mxu0 0
      %1768 = vmatprep.subr.bf16.mxu0 0
      %1769 = vmatpush1.bf16.msra.mxu0 0
      %1770 = vmatprep.subr.bf16.mxu0 0
      %1771 = vmatpush1.bf16.msra.mxu0 0
      %1772 = vmatprep.subr.bf16.mxu0 0
      %1773 = vmatpush1.bf16.msra.mxu0 0
      %1774 = vmatprep.subr.bf16.mxu0 0
      %1775 = vmatpush1.bf16.msra.mxu0 0
      %1776 = vmatprep.subr.bf16.mxu0 0
      %1777 = vmatpush1.bf16.msra.mxu0 0
      %1778 = vmatprep.subr.bf16.mxu0 0
      %1779 = vmatpush1.bf16.msra.mxu0 0
      %1780 = vmatprep.subr.bf16.mxu0 0
      %1781 = vmatpush1.bf16.msra.mxu0 0
      %1782 = vmatprep.subr.bf16.mxu0 0
      %1783 = vmatpush1.bf16.msra.mxu0 0
      %1784 = vmatprep.mubr.bf16.mxu0 0
      %1785 = vmatmul.mubr.bf16.gmra.mrb[0].mxu0 %v1748
      %v1786 = vpop.f32.mrb[0].mxu0
      %v1787 = vadd.f32 0.0, %v1786
      %v1788 = vpop.f32.mrb[0].mxu0
      %v1789 = vpop.f32.mrb[0].mxu0
      %v1790 = vadd.f32 0.0, %v1789
      %v1791 = vpop.f32.mrb[0].mxu0
      %1792 = vdwg.mxu0
      %v1793 = vpack.c.bf16 %v1694, %v1693
      %1795 = vrot.lane.b32.xlu0 %v1793, 96
      %v1796 = vpop.permute.xlu0 %1795
      %v1798 = vsel %vm976, %v1796, 0
      %1800 = vmatprep.subr.bf16.mxu0 0
      %1801 = vmatpush1.bf16.msra.mxu0 %v1343
      %1802 = vmatprep.subr.bf16.mxu0 0
      %1803 = vmatpush1.bf16.msra.mxu0 %v1344
      %1804 = vmatprep.subr.bf16.mxu0 0
      %1805 = vmatpush1.bf16.msra.mxu0 %v1345
      %1806 = vmatprep.subr.bf16.mxu0 0
      %1807 = vmatpush1.bf16.msra.mxu0 0
      %1808 = vmatprep.subr.bf16.mxu0 0
      %1809 = vmatpush1.bf16.msra.mxu0 0
      %1810 = vmatprep.subr.bf16.mxu0 0
      %1811 = vmatpush1.bf16.msra.mxu0 0
      %1812 = vmatprep.subr.bf16.mxu0 0
      %1813 = vmatpush1.bf16.msra.mxu0 0
      %1814 = vmatprep.subr.bf16.mxu0 0
      %1815 = vmatpush1.bf16.msra.mxu0 0
      %1816 = vmatprep.subr.bf16.mxu0 0
      %1817 = vmatpush1.bf16.msra.mxu0 0
      %1818 = vmatprep.subr.bf16.mxu0 0
      %1819 = vmatpush1.bf16.msra.mxu0 0
      %1820 = vmatprep.subr.bf16.mxu0 0
      %1821 = vmatpush1.bf16.msra.mxu0 0
      %1822 = vmatprep.subr.bf16.mxu0 0
      %1823 = vmatpush1.bf16.msra.mxu0 0
      %1824 = vmatprep.subr.bf16.mxu0 0
      %1825 = vmatpush1.bf16.msra.mxu0 0
      %1826 = vmatprep.subr.bf16.mxu0 0
      %1827 = vmatpush1.bf16.msra.mxu0 0
      %1828 = vmatprep.subr.bf16.mxu0 0
      %1829 = vmatpush1.bf16.msra.mxu0 0
      %1830 = vmatprep.subr.bf16.mxu0 0
      %1831 = vmatpush1.bf16.msra.mxu0 0
      %1832 = vmatprep.mubr.bf16.mxu0 0
      %1833 = vmatmul.mubr.bf16.gmra.mrb[0].mxu0 %v1798
      %v1834 = vpop.f32.mrb[0].mxu0
      %v1835 = vadd.f32 0.0, %v1834
      %v1836 = vpop.f32.mrb[0].mxu0
      %v1837 = vpop.f32.mrb[0].mxu0
      %v1838 = vadd.f32 0.0, %v1837
      %v1839 = vpop.f32.mrb[0].mxu0
      %1840 = vdwg.mxu0
      %1843 = vrot.lane.b32.xlu0 %v1787, 32
      %v1844 = vpop.permute.xlu0 %1843
      %1845 = vrot.lane.b32.xlu0 %v1790, 32
      %v1846 = vpop.permute.xlu0 %1845
      %1851 = vrot.lane.b32.xlu0 %v1835, 64
      %v1852 = vpop.permute.xlu0 %1851
      %1853 = vrot.lane.b32.xlu0 %v1838, 64
      %v1854 = vpop.permute.xlu0 %1853
      %1859 = vrot.lane.b32.xlu0 %v1335, 96
      %v1860 = vpop.permute.xlu0 %1859
      %1861 = vrot.lane.b32.xlu0 %v1336, 96
      %v1862 = vpop.permute.xlu0 %1861
      %v1865 = vsel %vm1074, %v1737, %v1844
      %v1866 = vsel %vm1074, %v1740, %v1846
      %vm1867 = vcmask 523264
      %v1868 = vsel %vm1867, %v1865, %v1852
      %v1869 = vsel %vm1867, %v1866, %v1854
      %vm1870 = vcmask 785408
      %v1871 = vsel %vm1870, %v1868, %v1860
      %v1872 = vsel %vm1870, %v1869, %v1862
      %v1873 = vpack.c.bf16 %v1872, %v1871
      %v1874 = vld [vmem:[%s12] sm:$0xf]
      %v1875 = vld [vmem:[%s12 + $0x4] sm:$0xf]
      %v1876 = vld [vmem:[%s12 + $0x8] sm:$0xf]
      %v1877 = vld [vmem:[%s12 + $0xc] sm:$0xf]
      %v1878 = vld [vmem:[%s12 + $0x10] sm:$0xf]
      %v1879 = vld [vmem:[%s12 + $0x14] sm:$0xf]
      %v1880 = vld [vmem:[%s12 + $0x18] sm:$0xf]
      %v1881 = vld [vmem:[%s12 + $0x1c] sm:$0xf]
      %v1882 = vld [vmem:[%s12 + $0x20] sm:$0xf]
      %v1883 = vld [vmem:[%s12 + $0x24] sm:$0xf]
      %v1884 = vld [vmem:[%s12 + $0x28] sm:$0xf]
      %v1885 = vld [vmem:[%s12 + $0x2c] sm:$0xf]
      %v1886 = vld [vmem:[%s12 + $0x30] sm:$0xf]
      %v1887 = vld [vmem:[%s12 + $0x34] sm:$0xf]
      %v1888 = vld [vmem:[%s12 + $0x38] sm:$0xf]
      %v1889 = vld [vmem:[%s12 + $0x3c] sm:$0xf]
      %v1890 = vld [vmem:[%s17] sm:$0x1]
      %v1892 = vlaneseq
      %v1893 = vshrl.u32 %v1892, 7
      %v1894 = vsub.s32 0, %v1893
      %v1895 = vrot.slane %v1890, %v1894
      %v1913 = vunpack.c.l.b16 %v1874
      %v1914 = vunpack.c.l.b16 %v1875
      %v1915 = vunpack.c.l.b16 %v1876
      %v1916 = vunpack.c.l.b16 %v1877
      %v1917 = vunpack.c.l.b16 %v1878
      %v1918 = vunpack.c.l.b16 %v1879
      %v1919 = vunpack.c.l.b16 %v1880
      %v1920 = vunpack.c.l.b16 %v1881
      %v1921 = vunpack.c.l.b16 %v1882
      %v1922 = vunpack.c.l.b16 %v1883
      %v1923 = vunpack.c.l.b16 %v1884
      %v1924 = vunpack.c.l.b16 %v1885
      %v1925 = vunpack.c.l.b16 %v1886
      %v1926 = vunpack.c.l.b16 %v1887
      %v1927 = vunpack.c.l.b16 %v1888
      %v1928 = vunpack.c.l.b16 %v1889
      %v1929 = vpack.c.b16 %v1914, %v1913
      %v1930 = vpack.c.b16 %v1916, %v1915
      %v1931 = vpack.c.b16 %v1918, %v1917
      %v1932 = vpack.c.b16 %v1920, %v1919
      %v1933 = vpack.c.b16 %v1922, %v1921
      %v1934 = vpack.c.b16 %v1924, %v1923
      %v1935 = vpack.c.b16 %v1926, %v1925
      %v1936 = vpack.c.b16 %v1928, %v1927
      %1945 = vmatprep.subr.bf16.mxu0 0
      %1946 = vmatpush1.bf16.msra.mxu0 %v1929
      %1947 = vmatprep.subr.bf16.mxu0 0
      %1948 = vmatpush1.bf16.msra.mxu0 %v1930
      %1949 = vmatprep.subr.bf16.mxu0 0
      %1950 = vmatpush1.bf16.msra.mxu0 %v1931
      %1951 = vmatprep.subr.bf16.mxu0 0
      %1952 = vmatpush1.bf16.msra.mxu0 %v1932
      %1953 = vmatprep.subr.bf16.mxu0 0
      %1954 = vmatpush1.bf16.msra.mxu0 %v1933
      %1955 = vmatprep.subr.bf16.mxu0 0
      %1956 = vmatpush1.bf16.msra.mxu0 %v1934
      %1957 = vmatprep.subr.bf16.mxu0 0
      %1958 = vmatpush1.bf16.msra.mxu0 %v1935
      %1959 = vmatprep.subr.bf16.mxu0 0
      %1960 = vmatpush1.bf16.msra.mxu0 %v1936
      %1961 = vmatprep.subr.bf16.mxu0 0
      %1962 = vmatpush1.bf16.msra.mxu0 0
      %1963 = vmatprep.subr.bf16.mxu0 0
      %1964 = vmatpush1.bf16.msra.mxu0 0
      %1965 = vmatprep.subr.bf16.mxu0 0
      %1966 = vmatpush1.bf16.msra.mxu0 0
      %1967 = vmatprep.subr.bf16.mxu0 0
      %1968 = vmatpush1.bf16.msra.mxu0 0
      %1969 = vmatprep.subr.bf16.mxu0 0
      %1970 = vmatpush1.bf16.msra.mxu0 0
      %1971 = vmatprep.subr.bf16.mxu0 0
      %1972 = vmatpush1.bf16.msra.mxu0 0
      %1973 = vmatprep.subr.bf16.mxu0 0
      %1974 = vmatpush1.bf16.msra.mxu0 0
      %1975 = vmatprep.subr.bf16.mxu0 0
      %1976 = vmatpush1.bf16.msra.mxu0 0
      %1977 = vmatprep.mubr.bf16.mxu0 0
      %1978 = vmatmul.mubr.bf16.gmra.mrb[0].mxu0 %v1873
      %v1979 = vpop.f32.mrb[0].mxu0
      %v1980 = vadd.f32 %v1895, %v1979
      %v1981 = vpop.f32.mrb[0].mxu0
      %v1982 = vpop.f32.mrb[0].mxu0
      %v1983 = vadd.f32 %v1895, %v1982
      %v1984 = vpop.f32.mrb[0].mxu0
      %1985 = vdwg.mxu0
      %v1986 = vtanh.pop %v1980
      %v1987 = vtanh.pop %v1983
      %1988 = vst.msk [vmem:[%s701] sm:$0xff] %vm1074, %v1986
      %vm1989 = vcmask 259072
      %1990 = vst.msk [vmem:[%s701 + $0x8] sm:$0x3f] %vm1989, %v1987
      %1991 = vset.pattern.permute.xlu0 0
      %1992 = vperm.xlu0 %1991, %v1119
      %v1993 = vpop.permute.xlu0 %1992
      %1995 = vset.pattern.permute.xlu0 0
      %1996 = vperm.xlu0 %1995, %v1120
      %v1997 = vpop.permute.xlu0 %1996
      %v1999 = vmul.f32 %v1598, %v1993
      %v2000 = vmul.f32 %v1599, %v1997
      %2001 = vset.pattern.permute.xlu0 1
      %2002 = vperm.xlu0 %2001, %v1119
      %v2003 = vpop.permute.xlu0 %2002
      %2005 = vset.pattern.permute.xlu0 1
      %2006 = vperm.xlu0 %2005, %v1120
      %v2007 = vpop.permute.xlu0 %2006
      %v2009 = vmul.f32 %v1598, %v2003
      %v2010 = vmul.f32 %v1599, %v2007
      %2013 = vrot.lane.b32.xlu0 %v2009, 116
      %v2014 = vpop.permute.xlu0 %2013
      %2015 = vrot.lane.b32.xlu0 %v2010, 116
      %v2016 = vpop.permute.xlu0 %2015
      %v2019 = vadd.f32 %v1999, %v2014
      %v2020 = vadd.f32 %v2000, %v2016
      %v2021 = vmul.f32 %v1646, %v1993
      %v2022 = vmul.f32 %v1647, %v1997
      %v2023 = vmul.f32 %v1646, %v2003
      %v2024 = vmul.f32 %v1647, %v2007
      %2027 = vrot.lane.b32.xlu0 %v2023, 124
      %v2028 = vpop.permute.xlu0 %2027
      %2029 = vrot.lane.b32.xlu0 %v2024, 124
      %v2030 = vpop.permute.xlu0 %2029
      %v2033 = vadd.f32 %v2021, %v2028
      %v2034 = vadd.f32 %v2022, %v2030
      %v2035 = vmul.f32 %v1693, %v1993
      %v2036 = vmul.f32 %v1694, %v1997
      %v2037 = vmul.f32 %v1693, %v2003
      %v2038 = vmul.f32 %v1694, %v2007
      %2041 = vrot.lane.b32.xlu0 %v2037, 104
      %v2042 = vpop.permute.xlu0 %2041
      %2043 = vrot.lane.b32.xlu0 %v2038, 104
      %v2044 = vpop.permute.xlu0 %2043
      %v2047 = vadd.f32 %v2035, %v2042
      %v2048 = vadd.f32 %v2036, %v2044
      %2051 = vrot.lane.b32.xlu0 %v2033, 116
      %v2052 = vpop.permute.xlu0 %2051
      %2053 = vrot.lane.b32.xlu0 %v2034, 116
      %v2054 = vpop.permute.xlu0 %2053
      %2059 = vrot.lane.b32.xlu0 %v2047, 112
      %v2060 = vpop.permute.xlu0 %2059
      %2061 = vrot.lane.b32.xlu0 %v2048, 112
      %v2062 = vpop.permute.xlu0 %2061
      %vm2065 = vcmask 97280
      %v2066 = vsel %vm2065, %v2019, %v2052
      %v2067 = vsel %vm2065, %v2020, %v2054
      %v2068 = vsel %vm734, %v2066, %v2060
      %v2069 = vsel %vm734, %v2067, %v2062
      %vm2070 = vcmask 326656
      %2071 = vst.msk [vmem:[%s706] sm:$0xff] %vm2070, %v2068
      %vm2072 = vcmask 324608
      %2073 = vst.msk [vmem:[%s706 + $0x8] sm:$0x3f] %vm2072, %v2069
      %p2074 = scmp.lt.s32.totalorder %s31, 1
      %s2075 = scalar_select %p2074, %s31, 1
      %s2076 = smul.addr %s2075, 2
      %s2077 = smul.addr %s2076, 8
      %s2078 = scalar_lea.vmem %s18, %s2077
      %p2079 = scmp.lt.s32.totalorder %s31, 1
      %s2080 = scalar_select %p2079, %s31, 1
      %s2081 = smul.addr %s2080, 2
      %s2082 = smul.addr %s2081, 8
      %s2083 = scalar_lea.vmem %s19, %s2082
      // Predicated region
      $region93: #{mem_model_forward.1} parent=91 // pred_check
        %p2084 = pneg %p457
      $region94: #{mem_model_forward.1} parent=91 // pred_check_branch
        %2086 = sbr.rel (%p2084) target = $region96
      $region95: #{mem_model_forward.1} parent=91 // pred_region
        _
      $region96: #{mem_model_forward.1} parent=91 // pred_fallthru
        _
      // Predicated region
      $region97: #{mem_model_forward.1} parent=91 // pred_check
        %p2087 = pneg %p483
      $region98: #{mem_model_forward.1} parent=91 // pred_check_branch
        %2089 = sbr.rel (%p2087) target = $region100
      $region99: #{mem_model_forward.1} parent=91 // pred_region
        _
      $region100: #{mem_model_forward.1} parent=91 // pred_fallthru
        _
    $region92: #{mem_model_forward.1} parent=5 // pred_fallthru
      _
    %p2090 = scmp.le.s32.totalorder 2, %s26
    // Predicated region
    $region101: #{mem_model_forward.1} parent=5 // pred_check
      %p2091 = pneg %p2090
    $region102: #{mem_model_forward.1} parent=5 // pred_check_branch
      %2093 = sbr.rel (%p2091) target = $region104
    $region103: #{mem_model_forward.1} parent=5 // pred_region
      %s2094 = ssub.s32 %s26, 2
      // Predicated region
      $region105: #{mem_model_forward.1} parent=103 // pred_check
        %p2095 = pneg %p463
      $region106: #{mem_model_forward.1} parent=103 // pred_check_branch
        %2097 = sbr.rel (%p2095) target = $region108
      $region107: #{mem_model_forward.1} parent=103 // pred_region
        %p2098 = scmp.lt.s32.totalorder %s32, 1
        %s2099 = scalar_select %p2098, %s32, 1
        %s2100 = smul.addr %s2099, 2
        %s2101 = smul.addr %s2100, 8
        %s2102 = scalar_lea.vmem %s18, %s2101
      $region108: #{mem_model_forward.1} parent=103 // pred_fallthru
        _
      // Predicated region
      $region109: #{mem_model_forward.1} parent=103 // pred_check
        %p2103 = pneg %p489
      $region110: #{mem_model_forward.1} parent=103 // pred_check_branch
        %2105 = sbr.rel (%p2103) target = $region112
      $region111: #{mem_model_forward.1} parent=103 // pred_region
        %p2106 = scmp.lt.s32.totalorder %s32, 1
        %s2107 = scalar_select %p2106, %s32, 1
        %s2108 = smul.addr %s2107, 2
        %s2109 = smul.addr %s2108, 8
        %s2110 = scalar_lea.vmem %s19, %s2109
      $region112: #{mem_model_forward.1} parent=103 // pred_fallthru
        _
    $region104: #{mem_model_forward.1} parent=5 // pred_fallthru
      _
  $region6: #{mem_model_forward.1} parent=0 // loop_footer
    %s30 = sadd.s32 1, %s26
  $region7: #{mem_model_forward.1} parent=0 // loop_footer_branch
    %25 = sbr.rel target = $region3
  $region8: #{mem_model_forward.1} parent=0 // loop_exit
    _

</llo_original>
